<compile_context>
chip_gen: v6e
topology: v6e:2x2x1
jax: 0.10.0
libtpu: 0.0.40
codegen_flags: <defaults>
</compile_context>

<pallas_src>
import functools

import jax
import jax.numpy as jnp
from jax.experimental import pallas as pl
from jax.experimental.pallas import tpu as pltpu


# ----------------------------------------------------------------------------
# Pallas kernel: dense complex-as-real 2-layer spectral MLP on a row tile
# ----------------------------------------------------------------------------
def _softshrink(v, lam):
    return jnp.where(v > lam, v - lam, jnp.where(v < -lam, v + lam, 0.0))


def _afno_spectral_kernel(x_ref, w1_ref, b1_ref, w2_ref, b2_ref, o_ref, *, lam):
    """Row-tile spectral MLP.

    x_ref : (TM, 2C)      bf16   lane-concat [real | imag] spectral coeffs
    w1_ref: (2C, 2Cf)     bf16   [[w1_r, w1_i], [-w1_i, w1_r]]
    b1_ref: (1, 2Cf)      f32    [b1_r | b1_i]
    w2_ref: (2Cf, 2C)     bf16   [[w2_r, w2_i], [-w2_i, w2_r]]
    b2_ref: (1, 2C)       f32    [b2_r | b2_i]
    o_ref : (TM, 2C)      bf16   [real | imag] output
    """
    # Layer 1: one dense MXU matmul implements the full complex product,
    # f32 accumulation; bias + relu in f32 on the VPU.
    o1 = jnp.dot(x_ref[...], w1_ref[...], preferred_element_type=jnp.float32)
    o1 = jnp.maximum(o1 + b1_ref[...], 0.0)

    # Layer 2: same dense complex product, then bias + softshrink.
    o2 = jnp.dot(o1.astype(jnp.bfloat16), w2_ref[...],
                 preferred_element_type=jnp.float32)
    o2 = o2 + b2_ref[...]

    # Single lane-dense store (no per-block slicing / concat).
    o_ref[...] = _softshrink(o2, lam).astype(o_ref.dtype)


# ----------------------------------------------------------------------------
# Wrapper: tile selection + pallas_call
# ----------------------------------------------------------------------------
def _round_up(x, m):
    return ((x + m - 1) // m) * m


def _choose_tile(M, C2, Cf2, *, in_bytes, out_bytes, weight_bytes):
    """Working-set based row-tile + VMEM-limit selection (all generations)."""
    # Double-buffered row I/O + layer-1 f32 activation temps.
    per_row = 2 * C2 * (in_bytes + out_bytes) + 2 * Cf2 * 4
    budget = 24 * 1024 * 1024                     # pipelined working-set target
    tm = max(8, ((budget - 2 * weight_bytes) // per_row) // 8 * 8)
    tm = min(tm, 2048)
    # Guarantee >= 2 grid steps where possible so both v7x TensorCores get work.
    tm = min(tm, max(8, _round_up(pl.cdiv(M, 2), 8)))
    # Never taller than the (8-aligned) problem itself.
    tm = min(tm, max(8, _round_up(M, 8)))
    # Only request the scoped VMEM we actually need (+ headroom).
    need = 2 * weight_bytes + tm * per_row + (2 << 20)
    vmem_limit = int(min(max(need, 8 << 20), 96 << 20))
    return int(tm), vmem_limit


def _spectral_block_mlp(spec2c, w1k, b1k, w2k, b2k, *, lam,
                        out_dtype=jnp.bfloat16):
    """spec2c: (M, 2C) bf16 [real|imag]. Returns (M, 2C) out_dtype [real|imag]."""
    M, C2 = spec2c.shape
    Cf2 = w1k.shape[1]
    weight_bytes = (w1k.size * w1k.dtype.itemsize + w2k.size * w2k.dtype.itemsize
                    + b1k.size * b1k.dtype.itemsize + b2k.size * b2k.dtype.itemsize)
    tm, vmem_limit = _choose_tile(
        M, C2, Cf2,
        in_bytes=spec2c.dtype.itemsize,
        out_bytes=jnp.dtype(out_dtype).itemsize,
        weight_bytes=weight_bytes)

    kernel = functools.partial(_afno_spectral_kernel, lam=lam)
    row_spec = pl.BlockSpec((tm, C2), lambda i: (i, 0))
    full = lambda a: pl.BlockSpec(a.shape, lambda i: (0,) * a.ndim)

    return pl.pallas_call(
        kernel,
        out_shape=jax.ShapeDtypeStruct((M, C2), out_dtype),
        grid=(pl.cdiv(M, tm),),
        in_specs=[row_spec, full(w1k), full(b1k), full(w2k), full(b2k)],
        out_specs=row_spec,
        compiler_params=pltpu.CompilerParams(
            dimension_semantics=("parallel",),
            vmem_limit_bytes=vmem_limit),
    )(spec2c, w1k, b1k, w2k, b2k)


# ----------------------------------------------------------------------------
# Parameters (mirror AFNO2D.__init__ shapes)
# ----------------------------------------------------------------------------
def init_afno2d_params(key, hidden_size, num_blocks=8, hidden_size_factor=1,
                       scale=0.02):
    assert hidden_size % num_blocks == 0
    bs = hidden_size // num_blocks
    bsf = bs * hidden_size_factor
    k1, k2, k3, k4 = jax.random.split(key, 4)
    return {
        "w1": scale * jax.random.normal(k1, (2, num_blocks, bs, bsf), jnp.float32),
        "b1": scale * jax.random.normal(k2, (2, num_blocks, bsf), jnp.float32),
        "w2": scale * jax.random.normal(k3, (2, num_blocks, bsf, bs), jnp.float32),
        "b2": scale * jax.random.normal(k4, (2, num_blocks, bs), jnp.float32),
    }


def _block_diag(w):
    """(nb, r, c) block stack -> dense (nb*r, nb*c) block-diagonal matrix."""
    return jax.scipy.linalg.block_diag(*w)


def _pack_params(params):
    """Kernel-ready complex-as-real dense layouts (built once per call)."""
    w1, b1, w2, b2 = params["w1"], params["b1"], params["w2"], params["b2"]
    w1r, w1i = _block_diag(w1[0]), _block_diag(w1[1])      # (C,  Cf)
    w2r, w2i = _block_diag(w2[0]), _block_diag(w2[1])      # (Cf, C)
    w1k = jnp.block([[w1r, w1i], [-w1i, w1r]]).astype(jnp.bfloat16)   # (2C, 2Cf)
    w2k = jnp.block([[w2r, w2i], [-w2i, w2r]]).astype(jnp.bfloat16)   # (2Cf, 2C)
    b1k = jnp.concatenate([b1[0].reshape(-1), b1[1].reshape(-1)])[None, :]
    b2k = jnp.concatenate([b2[0].reshape(-1), b2[1].reshape(-1)])[None, :]
    return w1k, b1k.astype(jnp.float32), w2k, b2k.astype(jnp.float32)


# ----------------------------------------------------------------------------
# Full AFNO2D forward
# ----------------------------------------------------------------------------
def afno2d_forward(x, params, *, sparsity_threshold=0.01,
                   hard_thresholding_fraction=1.0,
                   spectral_out_dtype=jnp.bfloat16):
    # TODO(synk): hard_thresholding_fraction < 1 (mode truncation) not
    # implemented; with the default 1.0 all rfft modes are kept (matches ref).
    assert hard_thresholding_fraction == 1.0

    bias = x
    dtype = x.dtype
    xf = x.astype(jnp.float32)
    B, C, H, W = xf.shape

    # NOTE: the reference does a *reshape* (memory reinterpretation), not a
    # permute, from NCHW to (B, H, W, C). Reproduce exactly.
    xc = jnp.fft.rfft2(xf.reshape(B, H, W, C), axes=(1, 2), norm="ortho")
    Hc, Wf = xc.shape[1], xc.shape[2]
    M = B * Hc * Wf

    # Lane-dense (M, 2C) slab: [real | imag]; bf16 MXU operands.
    xr = jnp.real(xc).reshape(M, C)
    xi = jnp.imag(xc).reshape(M, C)
    spec2c = jnp.concatenate([xr, xi], axis=-1).astype(jnp.bfloat16)

    w1k, b1k, w2k, b2k = _pack_params(params)
    out = _spectral_block_mlp(spec2c, w1k, b1k, w2k, b2k,
                              lam=sparsity_threshold,
                              out_dtype=spectral_out_dtype)

    out = out.astype(jnp.float32)
    yc = jax.lax.complex(out[:, :C], out[:, C:]).reshape(B, Hc, Wf, C)
    y = jnp.fft.irfft2(yc, s=(H, W), axes=(1, 2), norm="ortho")   # (B, H, W, C)
    y = y.reshape(B, C, H, W).astype(dtype)
    return y + bias


# ----------------------------------------------------------------------------
# Pure-JAX reference (mirrors the PyTorch einsum formulation), for sanity check
# ----------------------------------------------------------------------------
def _reference_forward(x, params, *, sparsity_threshold=0.01):
    bias = x
    xf = x.astype(jnp.float32)
    B, C, H, W = xf.shape
    w1, b1, w2, b2 = params["w1"], params["b1"], params["w2"], params["b2"]
    nb, bs = w1.shape[1], w1.shape[2]
    xc = jnp.fft.rfft2(xf.reshape(B, H, W, C), axes=(1, 2), norm="ortho")
    xb = xc.reshape(B, xc.shape[1], xc.shape[2], nb, bs)
    xr, xi = jnp.real(xb), jnp.imag(xb)
    ein = functools.partial(jnp.einsum, "...bi,bio->...bo")
    o1r = jax.nn.relu(ein(xr, w1[0]) - ein(xi, w1[1]) + b1[0])
    o1i = jax.nn.relu(ein(xi, w1[0]) + ein(xr, w1[1]) + b1[1])
    o2r = ein(o1r, w2[0]) - ein(o1i, w2[1]) + b2[0]
    o2i = ein(o1i, w2[0]) + ein(o1r, w2[1]) + b2[1]
    o2r = _softshrink(o2r, sparsity_threshold)
    o2i = _softshrink(o2i, sparsity_threshold)
    yc = jax.lax.complex(o2r, o2i).reshape(B, xc.shape[1], xc.shape[2], C)
    y = jnp.fft.irfft2(yc, s=(H, W), axes=(1, 2), norm="ortho")
    return y.reshape(B, C, H, W).astype(x.dtype) + bias


# ----------------------------------------------------------------------------
if __name__ == "__main__":
    key = jax.random.PRNGKey(0)
    kx, kp = jax.random.split(key)

    # hidden_size = 128 (num_blocks = 8 -> block_size = 16): 2C = 256 fills the
    # lane axis and the v6e/v7x MXU contraction; spatial 16x16, batch 2.
    B, C, H, W = 2, 128, 16, 16
    x = jax.random.normal(kx, (B, C, H, W), jnp.float32)
    params = init_afno2d_params(kp, hidden_size=C, num_blocks=8,
                                hidden_size_factor=1)

    fwd = jax.jit(functools.partial(afno2d_forward, sparsity_threshold=0.01))
    out = fwd(x, params)
    jax.block_until_ready(out)

    assert out.shape == (B, C, H, W) and out.dtype == x.dtype
    assert bool(jnp.isfinite(out).all())

    # Loose numerical check vs the f32 pure-JAX reference (kernel uses bf16
    # matmul operands and bf16 spectral write-back).
    ref = _reference_forward(x, params, sparsity_threshold=0.01)
    max_err = float(jnp.max(jnp.abs(out - ref)))
    assert max_err < 2e-1, f"max abs err vs reference: {max_err}"

    print("KERNEL_OK")
</pallas_src>

<mosaic_0001>
module attributes {stable_mosaic.version = 11 : i64} {
  func.func @_afno_spectral_kernel(%arg0: i32, %arg1: memref<144x256xbf16, #tpu.memory_space<vmem>>, %arg2: memref<256x256xbf16, #tpu.memory_space<vmem>>, %arg3: memref<1x256xf32, #tpu.memory_space<vmem>>, %arg4: memref<256x256xbf16, #tpu.memory_space<vmem>>, %arg5: memref<1x256xf32, #tpu.memory_space<vmem>>, %arg6: memref<144x256xbf16, #tpu.memory_space<vmem>>) attributes {dimension_semantics = [#tpu.dimension_semantics<parallel>], iteration_bounds = array<i64: 2>, scalar_prefetch = 0 : i64, scratch_operands = 0 : i64, tpu.core_type = #tpu.core_type<tc>, window_params = [{transform_indices = @transform_0, window_bounds = array<i64: 144, 256>}, {pipeline_mode = #tpu.pipeline_mode<synchronous>, transform_indices = @transform_1, window_bounds = array<i64: 256, 256>}, {pipeline_mode = #tpu.pipeline_mode<synchronous>, transform_indices = @transform_2, window_bounds = array<i64: 1, 256>}, {pipeline_mode = #tpu.pipeline_mode<synchronous>, transform_indices = @transform_3, window_bounds = array<i64: 256, 256>}, {pipeline_mode = #tpu.pipeline_mode<synchronous>, transform_indices = @transform_4, window_bounds = array<i64: 1, 256>}, {transform_indices = @transform_5, window_bounds = array<i64: 144, 256>}]} {
    %c0 = arith.constant 0 : index
    %c0_0 = arith.constant 0 : index
    %0 = vector.load %arg1[%c0, %c0_0] : memref<144x256xbf16, #tpu.memory_space<vmem>>, vector<144x256xbf16>
    %c0_1 = arith.constant 0 : index
    %c0_2 = arith.constant 0 : index
    %1 = vector.load %arg2[%c0_1, %c0_2] : memref<256x256xbf16, #tpu.memory_space<vmem>>, vector<256x256xbf16>
    %cst = arith.constant dense<0.000000e+00> : vector<144x256xf32>
    %2 = tpu.matmul %0, %1, %cst {dimension_numbers = #tpu.dot_dimension_numbers<[1], [0], [0], [1], [0, 0, 1, 1], [], []>} : vector<144x256xbf16>, vector<256x256xbf16>, vector<144x256xf32> -> vector<144x256xf32>
    %c0_3 = arith.constant 0 : index
    %c0_4 = arith.constant 0 : index
    %3 = vector.load %arg3[%c0_3, %c0_4] : memref<1x256xf32, #tpu.memory_space<vmem>>, vector<1x256xf32>
    %4 = vector.broadcast %3 : vector<1x256xf32> to vector<144x256xf32>
    %5 = arith.addf %2, %4 : vector<144x256xf32>
    %cst_5 = arith.constant 0.000000e+00 : f32
    %6 = vector.broadcast %cst_5 : f32 to vector<144x256xf32>
    %7 = arith.maximumf %5, %6 : vector<144x256xf32>
    %8 = arith.truncf %7 : vector<144x256xf32> to vector<144x256xbf16>
    %c0_6 = arith.constant 0 : index
    %c0_7 = arith.constant 0 : index
    %9 = vector.load %arg4[%c0_6, %c0_7] : memref<256x256xbf16, #tpu.memory_space<vmem>>, vector<256x256xbf16>
    %cst_8 = arith.constant dense<0.000000e+00> : vector<144x256xf32>
    %10 = tpu.matmul %8, %9, %cst_8 {dimension_numbers = #tpu.dot_dimension_numbers<[1], [0], [0], [1], [0, 0, 1, 1], [], []>} : vector<144x256xbf16>, vector<256x256xbf16>, vector<144x256xf32> -> vector<144x256xf32>
    %c0_9 = arith.constant 0 : index
    %c0_10 = arith.constant 0 : index
    %11 = vector.load %arg5[%c0_9, %c0_10] : memref<1x256xf32, #tpu.memory_space<vmem>>, vector<1x256xf32>
    %12 = vector.broadcast %11 : vector<1x256xf32> to vector<144x256xf32>
    %13 = arith.addf %10, %12 : vector<144x256xf32>
    %cst_11 = arith.constant 0.00999999977 : f32
    %14 = vector.broadcast %cst_11 : f32 to vector<144x256xf32>
    %15 = arith.cmpf ogt, %13, %14 : vector<144x256xf32>
    %cst_12 = arith.constant 0.00999999977 : f32
    %16 = vector.broadcast %cst_12 : f32 to vector<144x256xf32>
    %17 = arith.subf %13, %16 : vector<144x256xf32>
    %cst_13 = arith.constant -0.00999999977 : f32
    %18 = vector.broadcast %cst_13 : f32 to vector<144x256xf32>
    %19 = arith.cmpf olt, %13, %18 : vector<144x256xf32>
    %cst_14 = arith.constant 0.00999999977 : f32
    %20 = vector.broadcast %cst_14 : f32 to vector<144x256xf32>
    %21 = arith.addf %13, %20 : vector<144x256xf32>
    %cst_15 = arith.constant 0.000000e+00 : f32
    %22 = vector.broadcast %cst_15 : f32 to vector<144x256xf32>
    %23 = arith.select %19, %21, %22 : vector<144x256xi1>, vector<144x256xf32>
    %24 = arith.select %15, %17, %23 : vector<144x256xi1>, vector<144x256xf32>
    %25 = arith.truncf %24 : vector<144x256xf32> to vector<144x256xbf16>
    %c0_16 = arith.constant 0 : index
    %c0_17 = arith.constant 0 : index
    %26 = vector.load %arg6[%c0_16, %c0_17] : memref<144x256xbf16, #tpu.memory_space<vmem>>, vector<144x256xbf16>
    tpu.vector_store %arg6[%c0_16, %c0_17], %25 {strides = array<i32>} : memref<144x256xbf16, #tpu.memory_space<vmem>>, vector<144x256xbf16>,
    return
  }
  func.func @transform_0(%arg0: i32) -> (i32, i32) {
    %c0_i32 = arith.constant 0 : i32
    %c0_i32_0 = arith.constant 0 : i32
    return %arg0, %c0_i32 : i32, i32
  }
  func.func @transform_1(%arg0: i32) -> (i32, i32) {
    %c0_i32 = arith.constant 0 : i32
    %c0_i32_0 = arith.constant 0 : i32
    %c0_i32_1 = arith.constant 0 : i32
    return %c0_i32, %c0_i32_0 : i32, i32
  }
  func.func @transform_2(%arg0: i32) -> (i32, i32) {
    %c0_i32 = arith.constant 0 : i32
    %c0_i32_0 = arith.constant 0 : i32
    %c0_i32_1 = arith.constant 0 : i32
    return %c0_i32, %c0_i32_0 : i32, i32
  }
  func.func @transform_3(%arg0: i32) -> (i32, i32) {
    %c0_i32 = arith.constant 0 : i32
    %c0_i32_0 = arith.constant 0 : i32
    %c0_i32_1 = arith.constant 0 : i32
    return %c0_i32, %c0_i32_0 : i32, i32
  }
  func.func @transform_4(%arg0: i32) -> (i32, i32) {
    %c0_i32 = arith.constant 0 : i32
    %c0_i32_0 = arith.constant 0 : i32
    %c0_i32_1 = arith.constant 0 : i32
    return %c0_i32, %c0_i32_0 : i32, i32
  }
  func.func @transform_5(%arg0: i32) -> (i32, i32) {
    %c0_i32 = arith.constant 0 : i32
    %c0_i32_0 = arith.constant 0 : i32
    return %arg0, %c0_i32 : i32, i32
  }
}

</mosaic_0001>

<llo_original>
// kernel: squeeze.77
$region0: #{squeeze.77}
  %s0 = inlined_call_operand.vmem [shape: f32[1,8,16], index: 0, kind: input, shape index: {}]
  %s1 = inlined_call_operand.vmem [shape: f32[128], index: 1, kind: output, shape index: {}]
  $region1: #{squeeze.77} parent=0
    #allocation0 [shape = 'u8[4096]{0}', space=vmem, size = 0x1000, scoped, tag = 'scoped mem for output reshape']
    %v2 = vld [vmem:[%s0] sm:$0x1]
    %vm3 = vcmask 130048
    %4 = vst.msk [vmem:[#allocation0] sm:$0x1] %vm3, %v2
    %s5 = scalar_lea.vmem %s0, 7
    %v6 = vld [vmem:[%s5] sm:$0x1]
    %7 = vrot.lane.b32.xlu0 %v6, 112
    %v8 = vpop.permute.xlu0 %7
    %vm9 = vcmask 1048448
    %10 = vst.msk [vmem:[#allocation0] sm:$0x1] %vm9, %v8
    %s11 = scalar_lea.vmem %s0, 6
    %v12 = vld [vmem:[%s11] sm:$0x1]
    %13 = vrot.lane.b32.xlu0 %v12, 96
    %v14 = vpop.permute.xlu0 %13
    %vm15 = vcmask 917248
    %16 = vst.msk [vmem:[#allocation0] sm:$0x1] %vm15, %v14
    %s17 = scalar_lea.vmem %s0, 5
    %v18 = vld [vmem:[%s17] sm:$0x1]
    %19 = vrot.lane.b32.xlu0 %v18, 80
    %v20 = vpop.permute.xlu0 %19
    %vm21 = vcmask 786048
    %22 = vst.msk [vmem:[#allocation0] sm:$0x1] %vm21, %v20
    %s23 = scalar_lea.vmem %s0, 4
    %v24 = vld [vmem:[%s23] sm:$0x1]
    %25 = vrot.lane.b32.xlu0 %v24, 64
    %v26 = vpop.permute.xlu0 %25
    %vm27 = vcmask 654848
    %28 = vst.msk [vmem:[#allocation0] sm:$0x1] %vm27, %v26
    %s29 = scalar_lea.vmem %s0, 3
    %v30 = vld [vmem:[%s29] sm:$0x1]
    %31 = vrot.lane.b32.xlu0 %v30, 48
    %v32 = vpop.permute.xlu0 %31
    %vm33 = vcmask 523648
    %34 = vst.msk [vmem:[#allocation0] sm:$0x1] %vm33, %v32
    %s35 = scalar_lea.vmem %s0, 2
    %v36 = vld [vmem:[%s35] sm:$0x1]
    %37 = vrot.lane.b32.xlu0 %v36, 32
    %v38 = vpop.permute.xlu0 %37
    %vm39 = vcmask 392448
    %40 = vst.msk [vmem:[#allocation0] sm:$0x1] %vm39, %v38
    %s41 = scalar_lea.vmem %s0, 1
    %v42 = vld [vmem:[%s41] sm:$0x1]
    %43 = vrot.lane.b32.xlu0 %v42, 16
    %v44 = vpop.permute.xlu0 %43
    %vm45 = vcmask 261248
    %46 = vst.msk [vmem:[#allocation0] sm:$0x1] %vm45, %v44
    %s48 = sshll.u32 1, 1
    %s49 = ssub.s32 %s48, 1
    %v51 = vld [vmem:[#allocation0] sm:%s49]
    %s52 = sshll.u32 1, 1
    %s53 = ssub.s32 %s52, 1
    %54 = vst [vmem:[%s1] sm:%s53] %v51

// kernel: reverse.1
$region0: #{reverse.1}
  #allocation0 [shape = 's32[1]{0}', space=sflag, size = 0x4, scoped, tag = 'scoped memory for reverse.1']
  %s0 = inlined_call_operand.vmem [shape: f32[2,128,16,7], index: 0, kind: input, shape index: {}]
  %s1 = inlined_call_operand.vmem [shape: f32[2,128,16,7], index: 1, kind: output, shape index: {}]
  %s2 = scalar_lea.vmem %s0, 96
  %v3 = vld [vmem:[%s2] sm:$0xff]
  %4 = vst [vmem:[%s1] sm:$0xff] %v3
  %s5 = scalar_lea.vmem %s0, 208
  %v6 = vld [vmem:[%s5] sm:$0xff]
  %s7 = scalar_lea.vmem %s1, 112
  %8 = vst [vmem:[%s7] sm:$0xff] %v6
  %s9 = scalar_lea.vmem %s0, 80
  %v10 = vld [vmem:[%s9] sm:$0xff]
  %s11 = scalar_lea.vmem %s1, 16
  %12 = vst [vmem:[%s11] sm:$0xff] %v10
  %s13 = scalar_lea.vmem %s0, 192
  %v14 = vld [vmem:[%s13] sm:$0xff]
  %s15 = scalar_lea.vmem %s1, 128
  %16 = vst [vmem:[%s15] sm:$0xff] %v14
  %s17 = scalar_lea.vmem %s0, 64
  %v18 = vld [vmem:[%s17] sm:$0xff]
  %s19 = scalar_lea.vmem %s1, 32
  %20 = vst [vmem:[%s19] sm:$0xff] %v18
  %s21 = scalar_lea.vmem %s0, 176
  %v22 = vld [vmem:[%s21] sm:$0xff]
  %s23 = scalar_lea.vmem %s1, 144
  %24 = vst [vmem:[%s23] sm:$0xff] %v22
  %s25 = scalar_lea.vmem %s0, 48
  %v26 = vld [vmem:[%s25] sm:$0xff]
  %s27 = scalar_lea.vmem %s1, 48
  %28 = vst [vmem:[%s27] sm:$0xff] %v26
  %s29 = scalar_lea.vmem %s0, 160
  %v30 = vld [vmem:[%s29] sm:$0xff]
  %s31 = scalar_lea.vmem %s1, 160
  %32 = vst [vmem:[%s31] sm:$0xff] %v30
  %s33 = scalar_lea.vmem %s0, 32
  %v34 = vld [vmem:[%s33] sm:$0xff]
  %s35 = scalar_lea.vmem %s1, 64
  %36 = vst [vmem:[%s35] sm:$0xff] %v34
  %s37 = scalar_lea.vmem %s0, 144
  %v38 = vld [vmem:[%s37] sm:$0xff]
  %s39 = scalar_lea.vmem %s1, 176
  %40 = vst [vmem:[%s39] sm:$0xff] %v38
  %s41 = scalar_lea.vmem %s0, 16
  %v42 = vld [vmem:[%s41] sm:$0xff]
  %s43 = scalar_lea.vmem %s1, 80
  %44 = vst [vmem:[%s43] sm:$0xff] %v42
  %s45 = scalar_lea.vmem %s0, 128
  %v46 = vld [vmem:[%s45] sm:$0xff]
  %s47 = scalar_lea.vmem %s1, 192
  %48 = vst [vmem:[%s47] sm:$0xff] %v46
  %v49 = vld [vmem:[%s0] sm:$0xff]
  %s50 = scalar_lea.vmem %s1, 96
  %51 = vst [vmem:[%s50] sm:$0xff] %v49
  %s52 = scalar_lea.vmem %s0, 112
  %v53 = vld [vmem:[%s52] sm:$0xff]
  %s54 = scalar_lea.vmem %s1, 208
  %55 = vst [vmem:[%s54] sm:$0xff] %v53
  %s56 = scalar_lea.vmem %s0, 104
  %v57 = vld [vmem:[%s56] sm:$0xff]
  %s58 = scalar_lea.vmem %s1, 8
  %59 = vst [vmem:[%s58] sm:$0xff] %v57
  %s60 = scalar_lea.vmem %s0, 216
  %v61 = vld [vmem:[%s60] sm:$0xff]
  %s62 = scalar_lea.vmem %s1, 120
  %63 = vst [vmem:[%s62] sm:$0xff] %v61
  %s64 = scalar_lea.vmem %s0, 88
  %v65 = vld [vmem:[%s64] sm:$0xff]
  %s66 = scalar_lea.vmem %s1, 24
  %67 = vst [vmem:[%s66] sm:$0xff] %v65
  %s68 = scalar_lea.vmem %s0, 200
  %v69 = vld [vmem:[%s68] sm:$0xff]
  %s70 = scalar_lea.vmem %s1, 136
  %71 = vst [vmem:[%s70] sm:$0xff] %v69
  %s72 = scalar_lea.vmem %s0, 72
  %v73 = vld [vmem:[%s72] sm:$0xff]
  %s74 = scalar_lea.vmem %s1, 40
  %75 = vst [vmem:[%s74] sm:$0xff] %v73
  %s76 = scalar_lea.vmem %s0, 184
  %v77 = vld [vmem:[%s76] sm:$0xff]
  %s78 = scalar_lea.vmem %s1, 152
  %79 = vst [vmem:[%s78] sm:$0xff] %v77
  %s80 = scalar_lea.vmem %s0, 56
  %v81 = vld [vmem:[%s80] sm:$0xff]
  %s82 = scalar_lea.vmem %s1, 56
  %83 = vst [vmem:[%s82] sm:$0xff] %v81
  %s84 = scalar_lea.vmem %s0, 168
  %v85 = vld [vmem:[%s84] sm:$0xff]
  %s86 = scalar_lea.vmem %s1, 168
  %87 = vst [vmem:[%s86] sm:$0xff] %v85
  %s88 = scalar_lea.vmem %s0, 40
  %v89 = vld [vmem:[%s88] sm:$0xff]
  %s90 = scalar_lea.vmem %s1, 72
  %91 = vst [vmem:[%s90] sm:$0xff] %v89
  %s92 = scalar_lea.vmem %s0, 152
  %v93 = vld [vmem:[%s92] sm:$0xff]
  %s94 = scalar_lea.vmem %s1, 184
  %95 = vst [vmem:[%s94] sm:$0xff] %v93
  %s96 = scalar_lea.vmem %s0, 24
  %v97 = vld [vmem:[%s96] sm:$0xff]
  %s98 = scalar_lea.vmem %s1, 88
  %99 = vst [vmem:[%s98] sm:$0xff] %v97
  %s100 = scalar_lea.vmem %s0, 136
  %v101 = vld [vmem:[%s100] sm:$0xff]
  %s102 = scalar_lea.vmem %s1, 200
  %103 = vst [vmem:[%s102] sm:$0xff] %v101
  %s104 = scalar_lea.vmem %s0, 8
  %v105 = vld [vmem:[%s104] sm:$0xff]
  %s106 = scalar_lea.vmem %s1, 104
  %107 = vst [vmem:[%s106] sm:$0xff] %v105
  %s108 = scalar_lea.vmem %s0, 120
  %v109 = vld [vmem:[%s108] sm:$0xff]
  %s110 = scalar_lea.vmem %s1, 216
  %111 = vst [vmem:[%s110] sm:$0xff] %v109

// kernel: afno2d_forward.1
$region0: #{afno2d_forward.1}
  #allocation0 [shape = 'u32[]', space=smem, size = 0x4, offset = 0x4, fixed_abs, tag = 'smem constant byte address 0x4 - core index']
  #allocation1 [shape = 'u32[144,128]{1,0:T(1,128)}', space=vmem, size = 0x12000, scoped, tag = 'internal scratch']
  %s0 = inlined_call_operand.vmem [shape: bf16[288,256], index: 0, kind: input, shape index: {}]
  %s1 = inlined_call_operand.vmem [shape: bf16[256,256], index: 1, kind: input, shape index: {}]
  %s2 = inlined_call_operand.vmem [shape: f32[1,256], index: 2, kind: input, shape index: {}]
  %s3 = inlined_call_operand.vmem [shape: bf16[256,256], index: 3, kind: input, shape index: {}]
  %s4 = inlined_call_operand.vmem [shape: f32[1,256], index: 4, kind: input, shape index: {}]
  %s5 = inlined_call_operand.vmem [shape: bf16[288,256], index: 5, kind: output, shape index: {}]
  %s6 = sld [smem:[#allocation0]]
  $region53: #{afno2d_forward.1} parent=0
    _
  %s8 = ssub.s32 1, %s6
  %s9 = scalar_select 0, %s8, %s6
  loop: start=0, step=1, limit=4
  $region2: #{afno2d_forward.1} parent=0 // loop_pre_header
    _
  $region3: #{afno2d_forward.1} parent=0 // loop_header
    %s11 = sphi 0, %s15
    %p12 = scmp.ge.s32.totalorder %s11, 4
    %s21 = sphi 0, %s23
    %s24 = sphi 0, %s21
    %s25 = sphi 0, %s24
    %s41 = sphi 0, %s25
    %s45 = sphi 0, %s45
    %s47 = sphi 0, %s45
    %s48 = sphi 0, %s47
    %s62 = sphi 0, %s48
    %s66 = sphi 0, %s66
    %s68 = sphi 0, %s66
    %s69 = sphi 0, %s68
    %s83 = sphi 0, %s69
    %s87 = sphi 0, %s87
    %s89 = sphi 0, %s87
    %s90 = sphi 0, %s89
    %s104 = sphi 0, %s90
    %s108 = sphi 0, %s108
    %s110 = sphi 0, %s108
    %s111 = sphi 0, %s110
    %s125 = sphi 0, %s111
    %s131 = sphi 0, %s133
    %s134 = sphi 0, %s131
    %s135 = sphi 0, %s134
    %s151 = sphi 0, %s135
  $region4: #{afno2d_forward.1} parent=0 // loop_header_branch
    %14 = sbr.rel (%p12) target = $region8
  $region5: #{afno2d_forward.1} parent=0 // loop_body
    %s16 = ssub.s32 %s11, 1
    %s17 = ssub.s32 %s11, 2
    %s18 = sadd.s32 %s11, 1
    %s19 = ssub.s32 %s11, %s18
    %p20 = scmp.eq.s32.totalorder %s19, 0
    %s22 = sadd.s32 %s21, 1
    %s23 = scalar_select %p20, %s21, %s22
    %p26 = pneg %p20
    %p27 = scmp.eq.s32.totalorder %s11, 1
    %p28 = por %p26, %p27
    %p29 = scmp.ne.s32.totalorder %s21, %s24
    %p30 = scmp.eq.s32.totalorder %s11, 0
    %p31 = por %p29, %p30
    %p32 = scmp.ne.s32.totalorder %s21, %s24
    %p33 = scmp.eq.s32.totalorder %s16, 1
    %p34 = por %p32, %p33
    %p35 = scmp.ne.s32.totalorder %s24, %s25
    %p36 = scmp.eq.s32.totalorder %s16, 0
    %p37 = por %p35, %p36
    %p38 = scmp.ne.s32.totalorder %s24, %s25
    %p39 = scmp.eq.s32.totalorder %s17, 1
    %p40 = por %p38, %p39
    %p42 = scmp.ne.s32.totalorder %s25, %s41
    %p43 = scmp.eq.s32.totalorder %s17, 0
    %p44 = por %p42, %p43
    %s46 = sadd.s32 %s45, 1
    %p49 = scmp.eq.s32.totalorder %s11, 1
    %p50 = scmp.ne.s32.totalorder %s45, %s47
    %p51 = scmp.eq.s32.totalorder %s11, 0
    %p52 = por %p50, %p51
    %p53 = scmp.ne.s32.totalorder %s45, %s47
    %p54 = scmp.eq.s32.totalorder %s16, 1
    %p55 = por %p53, %p54
    %p56 = scmp.ne.s32.totalorder %s47, %s48
    %p57 = scmp.eq.s32.totalorder %s16, 0
    %p58 = por %p56, %p57
    %p59 = scmp.ne.s32.totalorder %s47, %s48
    %p60 = scmp.eq.s32.totalorder %s17, 1
    %p61 = por %p59, %p60
    %p63 = scmp.ne.s32.totalorder %s48, %s62
    %p64 = scmp.eq.s32.totalorder %s17, 0
    %p65 = por %p63, %p64
    %s67 = sadd.s32 %s66, 1
    %p70 = scmp.eq.s32.totalorder %s11, 1
    %p71 = scmp.ne.s32.totalorder %s66, %s68
    %p72 = scmp.eq.s32.totalorder %s11, 0
    %p73 = por %p71, %p72
    %p74 = scmp.ne.s32.totalorder %s66, %s68
    %p75 = scmp.eq.s32.totalorder %s16, 1
    %p76 = por %p74, %p75
    %p77 = scmp.ne.s32.totalorder %s68, %s69
    %p78 = scmp.eq.s32.totalorder %s16, 0
    %p79 = por %p77, %p78
    %p80 = scmp.ne.s32.totalorder %s68, %s69
    %p81 = scmp.eq.s32.totalorder %s17, 1
    %p82 = por %p80, %p81
    %p84 = scmp.ne.s32.totalorder %s69, %s83
    %p85 = scmp.eq.s32.totalorder %s17, 0
    %p86 = por %p84, %p85
    %s88 = sadd.s32 %s87, 1
    %p91 = scmp.eq.s32.totalorder %s11, 1
    %p92 = scmp.ne.s32.totalorder %s87, %s89
    %p93 = scmp.eq.s32.totalorder %s11, 0
    %p94 = por %p92, %p93
    %p95 = scmp.ne.s32.totalorder %s87, %s89
    %p96 = scmp.eq.s32.totalorder %s16, 1
    %p97 = por %p95, %p96
    %p98 = scmp.ne.s32.totalorder %s89, %s90
    %p99 = scmp.eq.s32.totalorder %s16, 0
    %p100 = por %p98, %p99
    %p101 = scmp.ne.s32.totalorder %s89, %s90
    %p102 = scmp.eq.s32.totalorder %s17, 1
    %p103 = por %p101, %p102
    %p105 = scmp.ne.s32.totalorder %s90, %s104
    %p106 = scmp.eq.s32.totalorder %s17, 0
    %p107 = por %p105, %p106
    %s109 = sadd.s32 %s108, 1
    %p112 = scmp.eq.s32.totalorder %s11, 1
    %p113 = scmp.ne.s32.totalorder %s108, %s110
    %p114 = scmp.eq.s32.totalorder %s11, 0
    %p115 = por %p113, %p114
    %p116 = scmp.ne.s32.totalorder %s108, %s110
    %p117 = scmp.eq.s32.totalorder %s16, 1
    %p118 = por %p116, %p117
    %p119 = scmp.ne.s32.totalorder %s110, %s111
    %p120 = scmp.eq.s32.totalorder %s16, 0
    %p121 = por %p119, %p120
    %p122 = scmp.ne.s32.totalorder %s110, %s111
    %p123 = scmp.eq.s32.totalorder %s17, 1
    %p124 = por %p122, %p123
    %p126 = scmp.ne.s32.totalorder %s111, %s125
    %p127 = scmp.eq.s32.totalorder %s17, 0
    %p128 = por %p126, %p127
    %s129 = ssub.s32 %s11, %s18
    %p130 = scmp.eq.s32.totalorder %s129, 0
    %s132 = sadd.s32 %s131, 1
    %s133 = scalar_select %p130, %s131, %s132
    %p136 = pneg %p130
    %p137 = scmp.eq.s32.totalorder %s11, 1
    %p138 = por %p136, %p137
    %p139 = scmp.ne.s32.totalorder %s131, %s134
    %p140 = scmp.eq.s32.totalorder %s11, 0
    %p141 = por %p139, %p140
    %p142 = scmp.ne.s32.totalorder %s131, %s134
    %p143 = scmp.eq.s32.totalorder %s16, 1
    %p144 = por %p142, %p143
    %p145 = scmp.ne.s32.totalorder %s134, %s135
    %p146 = scmp.eq.s32.totalorder %s16, 0
    %p147 = por %p145, %p146
    %p148 = scmp.ne.s32.totalorder %s134, %s135
    %p149 = scmp.eq.s32.totalorder %s17, 1
    %p150 = por %p148, %p149
    %p152 = scmp.ne.s32.totalorder %s135, %s151
    %p153 = scmp.eq.s32.totalorder %s17, 0
    %p154 = por %p152, %p153
    %p155 = scmp.le.s32.totalorder 1, %s11
    %p156 = scmp.lt.s32.totalorder %s11, 3
    %p157 = pnand %p155, %p156
    %p158 = pneg %p157
    // Predicated region
    $region9: #{afno2d_forward.1} parent=5 // pred_check
      _
    $region10: #{afno2d_forward.1} parent=5 // pred_check_branch
      %160 = sbr.rel (%p157) target = $region12
    $region11: #{afno2d_forward.1} parent=5 // pred_region
      %s161 = ssub.s32 %s11, 1
      // Predicated region
      $region13: #{afno2d_forward.1} parent=11 // pred_check
        %p162 = pneg %p58
      $region14: #{afno2d_forward.1} parent=11 // pred_check_branch
        %164 = sbr.rel (%p162) target = $region16
      $region15: #{afno2d_forward.1} parent=11 // pred_region
        _
      $region16: #{afno2d_forward.1} parent=11 // pred_fallthru
        _
      // Predicated region
      $region17: #{afno2d_forward.1} parent=11 // pred_check
        %p165 = pneg %p79
      $region18: #{afno2d_forward.1} parent=11 // pred_check_branch
        %167 = sbr.rel (%p165) target = $region20
      $region19: #{afno2d_forward.1} parent=11 // pred_region
        _
      $region20: #{afno2d_forward.1} parent=11 // pred_fallthru
        _
      // Predicated region
      $region21: #{afno2d_forward.1} parent=11 // pred_check
        %p168 = pneg %p100
      $region22: #{afno2d_forward.1} parent=11 // pred_check_branch
        %170 = sbr.rel (%p168) target = $region24
      $region23: #{afno2d_forward.1} parent=11 // pred_region
        _
      $region24: #{afno2d_forward.1} parent=11 // pred_fallthru
        _
      // Predicated region
      $region25: #{afno2d_forward.1} parent=11 // pred_check
        %p171 = pneg %p121
      $region26: #{afno2d_forward.1} parent=11 // pred_check_branch
        %173 = sbr.rel (%p171) target = $region28
      $region27: #{afno2d_forward.1} parent=11 // pred_region
        _
      $region28: #{afno2d_forward.1} parent=11 // pred_fallthru
        _
    $region12: #{afno2d_forward.1} parent=5 // pred_fallthru
      _
    %p174 = scmp.lt.s32.totalorder %s11, 2
    // Predicated region
    $region29: #{afno2d_forward.1} parent=5 // pred_check
      %p175 = pneg %p174
    $region30: #{afno2d_forward.1} parent=5 // pred_check_branch
      %177 = sbr.rel (%p175) target = $region32
    $region31: #{afno2d_forward.1} parent=5 // pred_region
      // Predicated region
      $region33: #{afno2d_forward.1} parent=31 // pred_check
        %p178 = pneg %p31
      $region34: #{afno2d_forward.1} parent=31 // pred_check_branch
        %180 = sbr.rel (%p178) target = $region36
      $region35: #{afno2d_forward.1} parent=31 // pred_region
        %s181 = smul.u32 18, %s11
        %p182 = scmp.lt.s32.totalorder %s181, 35
        %s183 = scalar_select %p182, %s181, 35
        %s184 = smul.addr %s183, 2
        %s185 = smul.addr %s184, 4
        %s186 = scalar_lea.vmem %s0, %s185
        %s187 = smul.u32 18, %s11
      $region36: #{afno2d_forward.1} parent=31 // pred_fallthru
        _
    $region32: #{afno2d_forward.1} parent=5 // pred_fallthru
      _
    %p188 = scmp.le.s32.totalorder 1, %s11
    %p189 = scmp.lt.s32.totalorder %s11, 3
    %p190 = pnand %p188, %p189
    %p191 = pneg %p190
    // Predicated region
    $region37: #{afno2d_forward.1} parent=5 // pred_check
      _
    $region38: #{afno2d_forward.1} parent=5 // pred_check_branch
      %193 = sbr.rel (%p190) target = $region40
    $region39: #{afno2d_forward.1} parent=5 // pred_region
      %s194 = ssub.s32 %s11, 1
      %s195 = smul.u32 18, %s16
      %p196 = scmp.lt.s32.totalorder %s195, 35
      %s197 = scalar_select %p196, %s195, 35
      %s198 = smul.addr %s197, 2
      %s199 = smul.addr %s198, 4
      %s200 = scalar_lea.vmem %s0, %s199
      %p201 = pneg %p37
      %p202 = pneg %p34
      %p203 = pneg %p58
      %p204 = pneg %p55
      %p205 = pneg %p79
      %p206 = pneg %p76
      %p207 = pneg %p100
      %p208 = pneg %p97
      %p209 = pneg %p121
      %p210 = pneg %p118
      %p211 = pneg %p147
      %p212 = pneg %p144
      %s213 = smul.u32 18, %s16
      %p214 = scmp.lt.s32.totalorder %s213, 35
      %s215 = scalar_select %p214, %s213, 35
      %s216 = smul.addr %s215, 2
      %s217 = smul.addr %s216, 4
      %s218 = scalar_lea.vmem %s5, %s217
      %s219 = smul.u32 18, %s16
      %p220 = scmp.lt.s32.totalorder %s219, 35
      %s221 = scalar_select %p220, %s219, 35
      %s222 = smul.addr %s221, 2
      %s223 = smul.addr %s222, 4
      %s224 = scalar_lea.vmem %s0, %s223
      %s225 = smul.u32 18, %s16
      %s226 = smul.u32 18, %s16
      %p227 = scmp.lt.s32.totalorder %s226, 35
      %s228 = scalar_select %p227, %s226, 35
      %s229 = smul.addr %s228, 2
      %s230 = smul.addr %s229, 4
      %s231 = scalar_lea.vmem %s5, %s230
      %s232 = smul.u32 18, %s16
      %v233 = vld [vmem:[%s224] sm:$0xff]
      %v234 = vld [vmem:[%s224 + $0x8] sm:$0xff]
      %v235 = vld [vmem:[%s224 + $0x10] sm:$0xff]
      %v236 = vld [vmem:[%s224 + $0x18] sm:$0xff]
      %v237 = vld [vmem:[%s224 + $0x20] sm:$0xff]
      %v238 = vld [vmem:[%s224 + $0x28] sm:$0xff]
      %v239 = vld [vmem:[%s224 + $0x30] sm:$0xff]
      %v240 = vld [vmem:[%s224 + $0x38] sm:$0xff]
      %v241 = vld [vmem:[%s224 + $0x40] sm:$0xff]
      %v242 = vld [vmem:[%s224 + $0x48] sm:$0xff]
      %v243 = vld [vmem:[%s224 + $0x50] sm:$0xff]
      %v244 = vld [vmem:[%s224 + $0x58] sm:$0xff]
      %v245 = vld [vmem:[%s224 + $0x60] sm:$0xff]
      %v246 = vld [vmem:[%s224 + $0x68] sm:$0xff]
      %v247 = vld [vmem:[%s224 + $0x70] sm:$0xff]
      %v248 = vld [vmem:[%s224 + $0x78] sm:$0xff]
      %v249 = vld [vmem:[%s224 + $0x80] sm:$0xff]
      %v250 = vld [vmem:[%s224 + $0x88] sm:$0xff]
      %v251 = vld [vmem:[%s1] sm:$0xff]
      %v252 = vld [vmem:[%s1 + $0x8] sm:$0xff]
      %v253 = vld [vmem:[%s1 + $0x10] sm:$0xff]
      %v254 = vld [vmem:[%s1 + $0x18] sm:$0xff]
      %v255 = vld [vmem:[%s1 + $0x20] sm:$0xff]
      %v256 = vld [vmem:[%s1 + $0x28] sm:$0xff]
      %v257 = vld [vmem:[%s1 + $0x30] sm:$0xff]
      %v258 = vld [vmem:[%s1 + $0x38] sm:$0xff]
      %v259 = vld [vmem:[%s1 + $0x40] sm:$0xff]
      %v260 = vld [vmem:[%s1 + $0x48] sm:$0xff]
      %v261 = vld [vmem:[%s1 + $0x50] sm:$0xff]
      %v262 = vld [vmem:[%s1 + $0x58] sm:$0xff]
      %v263 = vld [vmem:[%s1 + $0x60] sm:$0xff]
      %v264 = vld [vmem:[%s1 + $0x68] sm:$0xff]
      %v265 = vld [vmem:[%s1 + $0x70] sm:$0xff]
      %v266 = vld [vmem:[%s1 + $0x78] sm:$0xff]
      %v267 = vld [vmem:[%s1 + $0x80] sm:$0xff]
      %v268 = vld [vmem:[%s1 + $0x88] sm:$0xff]
      %v269 = vld [vmem:[%s1 + $0x90] sm:$0xff]
      %v270 = vld [vmem:[%s1 + $0x98] sm:$0xff]
      %v271 = vld [vmem:[%s1 + $0xa0] sm:$0xff]
      %v272 = vld [vmem:[%s1 + $0xa8] sm:$0xff]
      %v273 = vld [vmem:[%s1 + $0xb0] sm:$0xff]
      %v274 = vld [vmem:[%s1 + $0xb8] sm:$0xff]
      %v275 = vld [vmem:[%s1 + $0xc0] sm:$0xff]
      %v276 = vld [vmem:[%s1 + $0xc8] sm:$0xff]
      %v277 = vld [vmem:[%s1 + $0xd0] sm:$0xff]
      %v278 = vld [vmem:[%s1 + $0xd8] sm:$0xff]
      %v279 = vld [vmem:[%s1 + $0xe0] sm:$0xff]
      %v280 = vld [vmem:[%s1 + $0xe8] sm:$0xff]
      %v281 = vld [vmem:[%s1 + $0xf0] sm:$0xff]
      %v282 = vld [vmem:[%s1 + $0xf8] sm:$0xff]
      %v283 = vld [vmem:[%s2] sm:$0x3]
      %v285 = vlaneseq
      %v286 = vshrl.u32 %v285, 7
      %v287 = vsub.s32 0, %v286
      %v288 = vrot.slane %v283, %v287
      %v289 = vlaneseq
      %v290 = vshrl.u32 %v289, 7
      %v291 = vsub.s32 1, %v290
      %v292 = vrot.slane %v283, %v291
      %v313 = vunpack.c.l.b16 %v233
      %v314 = vunpack.c.h.b16 %v233
      %v315 = vunpack.c.l.b16 %v234
      %v316 = vunpack.c.h.b16 %v234
      %v317 = vunpack.c.l.b16 %v235
      %v318 = vunpack.c.h.b16 %v235
      %v319 = vunpack.c.l.b16 %v236
      %v320 = vunpack.c.h.b16 %v236
      %v321 = vunpack.c.l.b16 %v237
      %v322 = vunpack.c.h.b16 %v237
      %v323 = vunpack.c.l.b16 %v238
      %v324 = vunpack.c.h.b16 %v238
      %v325 = vunpack.c.l.b16 %v239
      %v326 = vunpack.c.h.b16 %v239
      %v327 = vunpack.c.l.b16 %v240
      %v328 = vunpack.c.h.b16 %v240
      %v329 = vunpack.c.l.b16 %v241
      %v330 = vunpack.c.h.b16 %v241
      %v331 = vunpack.c.l.b16 %v242
      %v332 = vunpack.c.h.b16 %v242
      %v333 = vunpack.c.l.b16 %v243
      %v334 = vunpack.c.h.b16 %v243
      %v335 = vunpack.c.l.b16 %v244
      %v336 = vunpack.c.h.b16 %v244
      %v337 = vunpack.c.l.b16 %v245
      %v338 = vunpack.c.h.b16 %v245
      %v339 = vunpack.c.l.b16 %v246
      %v340 = vunpack.c.h.b16 %v246
      %v341 = vunpack.c.l.b16 %v247
      %v342 = vunpack.c.h.b16 %v247
      %v343 = vunpack.c.l.b16 %v248
      %v344 = vunpack.c.h.b16 %v248
      %v345 = vunpack.c.l.b16 %v249
      %v346 = vunpack.c.h.b16 %v249
      %v347 = vunpack.c.l.b16 %v250
      %v348 = vunpack.c.h.b16 %v250
      %v349 = vpack.c.b16 %v315, %v313
      %v350 = vpack.c.b16 %v316, %v314
      %v351 = vpack.c.b16 %v319, %v317
      %v352 = vpack.c.b16 %v320, %v318
      %v353 = vpack.c.b16 %v323, %v321
      %v354 = vpack.c.b16 %v324, %v322
      %v355 = vpack.c.b16 %v327, %v325
      %v356 = vpack.c.b16 %v328, %v326
      %v357 = vpack.c.b16 %v331, %v329
      %v358 = vpack.c.b16 %v332, %v330
      %v359 = vpack.c.b16 %v335, %v333
      %v360 = vpack.c.b16 %v336, %v334
      %v361 = vpack.c.b16 %v339, %v337
      %v362 = vpack.c.b16 %v340, %v338
      %v363 = vpack.c.b16 %v343, %v341
      %v364 = vpack.c.b16 %v344, %v342
      %v365 = vpack.c.b16 %v347, %v345
      %v366 = vpack.c.b16 %v348, %v346
      %v417 = vunpack.c.l.b16 %v251
      %v418 = vunpack.c.h.b16 %v251
      %v419 = vunpack.c.l.b16 %v252
      %v420 = vunpack.c.h.b16 %v252
      %v421 = vunpack.c.l.b16 %v253
      %v422 = vunpack.c.h.b16 %v253
      %v423 = vunpack.c.l.b16 %v254
      %v424 = vunpack.c.h.b16 %v254
      %v425 = vunpack.c.l.b16 %v255
      %v426 = vunpack.c.h.b16 %v255
      %v427 = vunpack.c.l.b16 %v256
      %v428 = vunpack.c.h.b16 %v256
      %v429 = vunpack.c.l.b16 %v257
      %v430 = vunpack.c.h.b16 %v257
      %v431 = vunpack.c.l.b16 %v258
      %v432 = vunpack.c.h.b16 %v258
      %v433 = vunpack.c.l.b16 %v259
      %v434 = vunpack.c.h.b16 %v259
      %v435 = vunpack.c.l.b16 %v260
      %v436 = vunpack.c.h.b16 %v260
      %v437 = vunpack.c.l.b16 %v261
      %v438 = vunpack.c.h.b16 %v261
      %v439 = vunpack.c.l.b16 %v262
      %v440 = vunpack.c.h.b16 %v262
      %v441 = vunpack.c.l.b16 %v263
      %v442 = vunpack.c.h.b16 %v263
      %v443 = vunpack.c.l.b16 %v264
      %v444 = vunpack.c.h.b16 %v264
      %v445 = vunpack.c.l.b16 %v265
      %v446 = vunpack.c.h.b16 %v265
      %v447 = vunpack.c.l.b16 %v266
      %v448 = vunpack.c.h.b16 %v266
      %v449 = vunpack.c.l.b16 %v267
      %v450 = vunpack.c.h.b16 %v267
      %v451 = vunpack.c.l.b16 %v268
      %v452 = vunpack.c.h.b16 %v268
      %v453 = vunpack.c.l.b16 %v269
      %v454 = vunpack.c.h.b16 %v269
      %v455 = vunpack.c.l.b16 %v270
      %v456 = vunpack.c.h.b16 %v270
      %v457 = vunpack.c.l.b16 %v271
      %v458 = vunpack.c.h.b16 %v271
      %v459 = vunpack.c.l.b16 %v272
      %v460 = vunpack.c.h.b16 %v272
      %v461 = vunpack.c.l.b16 %v273
      %v462 = vunpack.c.h.b16 %v273
      %v463 = vunpack.c.l.b16 %v274
      %v464 = vunpack.c.h.b16 %v274
      %v465 = vunpack.c.l.b16 %v275
      %v466 = vunpack.c.h.b16 %v275
      %v467 = vunpack.c.l.b16 %v276
      %v468 = vunpack.c.h.b16 %v276
      %v469 = vunpack.c.l.b16 %v277
      %v470 = vunpack.c.h.b16 %v277
      %v471 = vunpack.c.l.b16 %v278
      %v472 = vunpack.c.h.b16 %v278
      %v473 = vunpack.c.l.b16 %v279
      %v474 = vunpack.c.h.b16 %v279
      %v475 = vunpack.c.l.b16 %v280
      %v476 = vunpack.c.h.b16 %v280
      %v477 = vunpack.c.l.b16 %v281
      %v478 = vunpack.c.h.b16 %v281
      %v479 = vunpack.c.l.b16 %v282
      %v480 = vunpack.c.h.b16 %v282
      %v481 = vpack.c.b16 %v419, %v417
      %v482 = vpack.c.b16 %v420, %v418
      %v483 = vpack.c.b16 %v423, %v421
      %v484 = vpack.c.b16 %v424, %v422
      %v485 = vpack.c.b16 %v427, %v425
      %v486 = vpack.c.b16 %v428, %v426
      %v487 = vpack.c.b16 %v431, %v429
      %v488 = vpack.c.b16 %v432, %v430
      %v489 = vpack.c.b16 %v435, %v433
      %v490 = vpack.c.b16 %v436, %v434
      %v491 = vpack.c.b16 %v439, %v437
      %v492 = vpack.c.b16 %v440, %v438
      %v493 = vpack.c.b16 %v443, %v441
      %v494 = vpack.c.b16 %v444, %v442
      %v495 = vpack.c.b16 %v447, %v445
      %v496 = vpack.c.b16 %v448, %v446
      %v497 = vpack.c.b16 %v451, %v449
      %v498 = vpack.c.b16 %v452, %v450
      %v499 = vpack.c.b16 %v455, %v453
      %v500 = vpack.c.b16 %v456, %v454
      %v501 = vpack.c.b16 %v459, %v457
      %v502 = vpack.c.b16 %v460, %v458
      %v503 = vpack.c.b16 %v463, %v461
      %v504 = vpack.c.b16 %v464, %v462
      %v505 = vpack.c.b16 %v467, %v465
      %v506 = vpack.c.b16 %v468, %v466
      %v507 = vpack.c.b16 %v471, %v469
      %v508 = vpack.c.b16 %v472, %v470
      %v509 = vpack.c.b16 %v475, %v473
      %v510 = vpack.c.b16 %v476, %v474
      %v511 = vpack.c.b16 %v479, %v477
      %v512 = vpack.c.b16 %v480, %v478
      %545 = vmatprep.subr.bf16.mxu0 %v496
      %546 = vmatpush1.bf16.msra.mxu0 %v495
      %547 = vmatprep.subr.bf16.mxu0 %v494
      %548 = vmatpush1.bf16.msra.mxu0 %v493
      %549 = vmatprep.subr.bf16.mxu0 %v492
      %550 = vmatpush1.bf16.msra.mxu0 %v491
      %551 = vmatprep.subr.bf16.mxu0 %v490
      %552 = vmatpush1.bf16.msra.mxu0 %v489
      %553 = vmatprep.subr.bf16.mxu0 %v488
      %554 = vmatpush1.bf16.msra.mxu0 %v487
      %555 = vmatprep.subr.bf16.mxu0 %v486
      %556 = vmatpush1.bf16.msra.mxu0 %v485
      %557 = vmatprep.subr.bf16.mxu0 %v484
      %558 = vmatpush1.bf16.msra.mxu0 %v483
      %559 = vmatprep.subr.bf16.mxu0 %v482
      %560 = vmatpush1.bf16.msra.mxu0 %v481
      %561 = vmatprep.subr.bf16.mxu0 %v512
      %562 = vmatpush2.bf16.msra.mxu0 %v511
      %563 = vmatprep.subr.bf16.mxu0 %v510
      %564 = vmatpush2.bf16.msra.mxu0 %v509
      %565 = vmatprep.subr.bf16.mxu0 %v508
      %566 = vmatpush2.bf16.msra.mxu0 %v507
      %567 = vmatprep.subr.bf16.mxu0 %v506
      %568 = vmatpush2.bf16.msra.mxu0 %v505
      %569 = vmatprep.subr.bf16.mxu0 %v504
      %570 = vmatpush2.bf16.msra.mxu0 %v503
      %571 = vmatprep.subr.bf16.mxu0 %v502
      %572 = vmatpush2.bf16.msra.mxu0 %v501
      %573 = vmatprep.subr.bf16.mxu0 %v500
      %574 = vmatpush2.bf16.msra.mxu0 %v499
      %575 = vmatprep.subr.bf16.mxu0 %v498
      %576 = vmatpush2.bf16.msra.mxu0 %v497
      %577 = vmatprep.mubr.bf16.mxu0 %v350
      %578 = vmatmul.mubr.bf16.gmra.mxu0 %v349
      %v579 = vpop.f32.mrf.mxu0
      %v580 = vadd.f32 %v288, %v579
      %v581 = vpop.f32.mrf.mxu0
      %v582 = vadd.f32 %v292, %v581
      %v583 = vpop.f32.mrf.mxu0
      %v584 = vadd.f32 %v288, %v583
      %v585 = vpop.f32.mrf.mxu0
      %v586 = vadd.f32 %v292, %v585
      %587 = vmatprep.mubr.bf16.mxu0 %v352
      %588 = vmatmul.mubr.bf16.gmra.mxu0 %v351
      %v589 = vpop.f32.mrf.mxu0
      %v590 = vadd.f32 %v288, %v589
      %v591 = vpop.f32.mrf.mxu0
      %v592 = vadd.f32 %v292, %v591
      %v593 = vpop.f32.mrf.mxu0
      %v594 = vadd.f32 %v288, %v593
      %v595 = vpop.f32.mrf.mxu0
      %v596 = vadd.f32 %v292, %v595
      %597 = vmatprep.mubr.bf16.mxu0 %v354
      %598 = vmatmul.mubr.bf16.gmra.mxu0 %v353
      %v599 = vpop.f32.mrf.mxu0
      %v600 = vadd.f32 %v288, %v599
      %v601 = vpop.f32.mrf.mxu0
      %v602 = vadd.f32 %v292, %v601
      %v603 = vpop.f32.mrf.mxu0
      %v604 = vadd.f32 %v288, %v603
      %v605 = vpop.f32.mrf.mxu0
      %v606 = vadd.f32 %v292, %v605
      %607 = vmatprep.mubr.bf16.mxu0 %v356
      %608 = vmatmul.mubr.bf16.gmra.mxu0 %v355
      %v609 = vpop.f32.mrf.mxu0
      %v610 = vadd.f32 %v288, %v609
      %v611 = vpop.f32.mrf.mxu0
      %v612 = vadd.f32 %v292, %v611
      %v613 = vpop.f32.mrf.mxu0
      %v614 = vadd.f32 %v288, %v613
      %v615 = vpop.f32.mrf.mxu0
      %v616 = vadd.f32 %v292, %v615
      %617 = vmatprep.mubr.bf16.mxu0 %v358
      %618 = vmatmul.mubr.bf16.gmra.mxu0 %v357
      %v619 = vpop.f32.mrf.mxu0
      %v620 = vadd.f32 %v288, %v619
      %v621 = vpop.f32.mrf.mxu0
      %v622 = vadd.f32 %v292, %v621
      %v623 = vpop.f32.mrf.mxu0
      %v624 = vadd.f32 %v288, %v623
      %v625 = vpop.f32.mrf.mxu0
      %v626 = vadd.f32 %v292, %v625
      %627 = vmatprep.mubr.bf16.mxu0 %v360
      %628 = vmatmul.mubr.bf16.gmra.mxu0 %v359
      %v629 = vpop.f32.mrf.mxu0
      %v630 = vadd.f32 %v288, %v629
      %v631 = vpop.f32.mrf.mxu0
      %v632 = vadd.f32 %v292, %v631
      %v633 = vpop.f32.mrf.mxu0
      %v634 = vadd.f32 %v288, %v633
      %v635 = vpop.f32.mrf.mxu0
      %v636 = vadd.f32 %v292, %v635
      %637 = vmatprep.mubr.bf16.mxu0 %v362
      %638 = vmatmul.mubr.bf16.gmra.mxu0 %v361
      %v639 = vpop.f32.mrf.mxu0
      %v640 = vadd.f32 %v288, %v639
      %v641 = vpop.f32.mrf.mxu0
      %v642 = vadd.f32 %v292, %v641
      %v643 = vpop.f32.mrf.mxu0
      %v644 = vadd.f32 %v288, %v643
      %v645 = vpop.f32.mrf.mxu0
      %v646 = vadd.f32 %v292, %v645
      %647 = vmatprep.mubr.bf16.mxu0 %v364
      %648 = vmatmul.mubr.bf16.gmra.mxu0 %v363
      %v649 = vpop.f32.mrf.mxu0
      %v650 = vadd.f32 %v288, %v649
      %v651 = vpop.f32.mrf.mxu0
      %v652 = vadd.f32 %v292, %v651
      %v653 = vpop.f32.mrf.mxu0
      %v654 = vadd.f32 %v288, %v653
      %v655 = vpop.f32.mrf.mxu0
      %v656 = vadd.f32 %v292, %v655
      %657 = vmatprep.mubr.bf16.mxu0 %v366
      %658 = vmatmul.mubr.bf16.gmra.mxu0 %v365
      %v659 = vpop.f32.mrf.mxu0
      %v660 = vadd.f32 %v288, %v659
      %v661 = vpop.f32.mrf.mxu0
      %v662 = vadd.f32 %v292, %v661
      %v663 = vpop.f32.mrf.mxu0
      %v664 = vadd.f32 %v288, %v663
      %v665 = vpop.f32.mrf.mxu0
      %v666 = vadd.f32 %v292, %v665
      %667 = vdwg.mxu0
      %v668 = vmax.f32 %v580, 0.0
      %v669 = vmax.f32 %v582, 0.0
      %v670 = vmax.f32 %v584, 0.0
      %v671 = vmax.f32 %v586, 0.0
      %v672 = vmax.f32 %v590, 0.0
      %v673 = vmax.f32 %v592, 0.0
      %v674 = vmax.f32 %v594, 0.0
      %v675 = vmax.f32 %v596, 0.0
      %v676 = vmax.f32 %v600, 0.0
      %v677 = vmax.f32 %v602, 0.0
      %v678 = vmax.f32 %v604, 0.0
      %v679 = vmax.f32 %v606, 0.0
      %v680 = vmax.f32 %v610, 0.0
      %v681 = vmax.f32 %v612, 0.0
      %v682 = vmax.f32 %v614, 0.0
      %v683 = vmax.f32 %v616, 0.0
      %v684 = vmax.f32 %v620, 0.0
      %v685 = vmax.f32 %v622, 0.0
      %v686 = vmax.f32 %v624, 0.0
      %v687 = vmax.f32 %v626, 0.0
      %v688 = vmax.f32 %v630, 0.0
      %v689 = vmax.f32 %v632, 0.0
      %v690 = vmax.f32 %v634, 0.0
      %v691 = vmax.f32 %v636, 0.0
      %v692 = vmax.f32 %v640, 0.0
      %v693 = vmax.f32 %v642, 0.0
      %v694 = vmax.f32 %v644, 0.0
      %v695 = vmax.f32 %v646, 0.0
      %v696 = vmax.f32 %v650, 0.0
      %v697 = vmax.f32 %v652, 0.0
      %v698 = vmax.f32 %v654, 0.0
      %v699 = vmax.f32 %v656, 0.0
      %v700 = vmax.f32 %v660, 0.0
      %v701 = vmax.f32 %v662, 0.0
      %v702 = vmax.f32 %v664, 0.0
      %v703 = vmax.f32 %v666, 0.0
      %v704 = vpack.c.bf16 %v670, %v668
      %v705 = vpack.c.bf16 %v671, %v669
      %v706 = vpack.c.bf16 %v674, %v672
      %v707 = vpack.c.bf16 %v675, %v673
      %v708 = vpack.c.bf16 %v678, %v676
      %v709 = vpack.c.bf16 %v679, %v677
      %v710 = vpack.c.bf16 %v682, %v680
      %v711 = vpack.c.bf16 %v683, %v681
      %v712 = vpack.c.bf16 %v686, %v684
      %v713 = vpack.c.bf16 %v687, %v685
      %v714 = vpack.c.bf16 %v690, %v688
      %v715 = vpack.c.bf16 %v691, %v689
      %v716 = vpack.c.bf16 %v694, %v692
      %v717 = vpack.c.bf16 %v695, %v693
      %v718 = vpack.c.bf16 %v698, %v696
      %v719 = vpack.c.bf16 %v699, %v697
      %v720 = vpack.c.bf16 %v702, %v700
      %v721 = vpack.c.bf16 %v703, %v701
      %v722 = vld [vmem:[%s3] sm:$0xff]
      %v723 = vld [vmem:[%s3 + $0x8] sm:$0xff]
      %v724 = vld [vmem:[%s3 + $0x10] sm:$0xff]
      %v725 = vld [vmem:[%s3 + $0x18] sm:$0xff]
      %v726 = vld [vmem:[%s3 + $0x20] sm:$0xff]
      %v727 = vld [vmem:[%s3 + $0x28] sm:$0xff]
      %v728 = vld [vmem:[%s3 + $0x30] sm:$0xff]
      %v729 = vld [vmem:[%s3 + $0x38] sm:$0xff]
      %v730 = vld [vmem:[%s3 + $0x40] sm:$0xff]
      %v731 = vld [vmem:[%s3 + $0x48] sm:$0xff]
      %v732 = vld [vmem:[%s3 + $0x50] sm:$0xff]
      %v733 = vld [vmem:[%s3 + $0x58] sm:$0xff]
      %v734 = vld [vmem:[%s3 + $0x60] sm:$0xff]
      %v735 = vld [vmem:[%s3 + $0x68] sm:$0xff]
      %v736 = vld [vmem:[%s3 + $0x70] sm:$0xff]
      %v737 = vld [vmem:[%s3 + $0x78] sm:$0xff]
      %v738 = vld [vmem:[%s3 + $0x80] sm:$0xff]
      %v739 = vld [vmem:[%s3 + $0x88] sm:$0xff]
      %v740 = vld [vmem:[%s3 + $0x90] sm:$0xff]
      %v741 = vld [vmem:[%s3 + $0x98] sm:$0xff]
      %v742 = vld [vmem:[%s3 + $0xa0] sm:$0xff]
      %v743 = vld [vmem:[%s3 + $0xa8] sm:$0xff]
      %v744 = vld [vmem:[%s3 + $0xb0] sm:$0xff]
      %v745 = vld [vmem:[%s3 + $0xb8] sm:$0xff]
      %v746 = vld [vmem:[%s3 + $0xc0] sm:$0xff]
      %v747 = vld [vmem:[%s3 + $0xc8] sm:$0xff]
      %v748 = vld [vmem:[%s3 + $0xd0] sm:$0xff]
      %v749 = vld [vmem:[%s3 + $0xd8] sm:$0xff]
      %v750 = vld [vmem:[%s3 + $0xe0] sm:$0xff]
      %v751 = vld [vmem:[%s3 + $0xe8] sm:$0xff]
      %v752 = vld [vmem:[%s3 + $0xf0] sm:$0xff]
      %v753 = vld [vmem:[%s3 + $0xf8] sm:$0xff]
      %v754 = vld [vmem:[%s4] sm:$0x3]
      %v756 = vlaneseq
      %v757 = vshrl.u32 %v756, 7
      %v758 = vsub.s32 0, %v757
      %v759 = vrot.slane %v754, %v758
      %v760 = vlaneseq
      %v761 = vshrl.u32 %v760, 7
      %v762 = vsub.s32 1, %v761
      %v763 = vrot.slane %v754, %v762
      %v798 = vunpack.c.l.b16 %v722
      %v799 = vunpack.c.h.b16 %v722
      %v800 = vunpack.c.l.b16 %v723
      %v801 = vunpack.c.h.b16 %v723
      %v802 = vunpack.c.l.b16 %v724
      %v803 = vunpack.c.h.b16 %v724
      %v804 = vunpack.c.l.b16 %v725
      %v805 = vunpack.c.h.b16 %v725
      %v806 = vunpack.c.l.b16 %v726
      %v807 = vunpack.c.h.b16 %v726
      %v808 = vunpack.c.l.b16 %v727
      %v809 = vunpack.c.h.b16 %v727
      %v810 = vunpack.c.l.b16 %v728
      %v811 = vunpack.c.h.b16 %v728
      %v812 = vunpack.c.l.b16 %v729
      %v813 = vunpack.c.h.b16 %v729
      %v814 = vunpack.c.l.b16 %v730
      %v815 = vunpack.c.h.b16 %v730
      %v816 = vunpack.c.l.b16 %v731
      %v817 = vunpack.c.h.b16 %v731
      %v818 = vunpack.c.l.b16 %v732
      %v819 = vunpack.c.h.b16 %v732
      %v820 = vunpack.c.l.b16 %v733
      %v821 = vunpack.c.h.b16 %v733
      %v822 = vunpack.c.l.b16 %v734
      %v823 = vunpack.c.h.b16 %v734
      %v824 = vunpack.c.l.b16 %v735
      %v825 = vunpack.c.h.b16 %v735
      %v826 = vunpack.c.l.b16 %v736
      %v827 = vunpack.c.h.b16 %v736
      %v828 = vunpack.c.l.b16 %v737
      %v829 = vunpack.c.h.b16 %v737
      %v830 = vunpack.c.l.b16 %v738
      %v831 = vunpack.c.h.b16 %v738
      %v832 = vunpack.c.l.b16 %v739
      %v833 = vunpack.c.h.b16 %v739
      %v834 = vunpack.c.l.b16 %v740
      %v835 = vunpack.c.h.b16 %v740
      %v836 = vunpack.c.l.b16 %v741
      %v837 = vunpack.c.h.b16 %v741
      %v838 = vunpack.c.l.b16 %v742
      %v839 = vunpack.c.h.b16 %v742
      %v840 = vunpack.c.l.b16 %v743
      %v841 = vunpack.c.h.b16 %v743
      %v842 = vunpack.c.l.b16 %v744
      %v843 = vunpack.c.h.b16 %v744
      %v844 = vunpack.c.l.b16 %v745
      %v845 = vunpack.c.h.b16 %v745
      %v846 = vunpack.c.l.b16 %v746
      %v847 = vunpack.c.h.b16 %v746
      %v848 = vunpack.c.l.b16 %v747
      %v849 = vunpack.c.h.b16 %v747
      %v850 = vunpack.c.l.b16 %v748
      %v851 = vunpack.c.h.b16 %v748
      %v852 = vunpack.c.l.b16 %v749
      %v853 = vunpack.c.h.b16 %v749
      %v854 = vunpack.c.l.b16 %v750
      %v855 = vunpack.c.h.b16 %v750
      %v856 = vunpack.c.l.b16 %v751
      %v857 = vunpack.c.h.b16 %v751
      %v858 = vunpack.c.l.b16 %v752
      %v859 = vunpack.c.h.b16 %v752
      %v860 = vunpack.c.l.b16 %v753
      %v861 = vunpack.c.h.b16 %v753
      %v862 = vpack.c.b16 %v800, %v798
      %v863 = vpack.c.b16 %v801, %v799
      %v864 = vpack.c.b16 %v804, %v802
      %v865 = vpack.c.b16 %v805, %v803
      %v866 = vpack.c.b16 %v808, %v806
      %v867 = vpack.c.b16 %v809, %v807
      %v868 = vpack.c.b16 %v812, %v810
      %v869 = vpack.c.b16 %v813, %v811
      %v870 = vpack.c.b16 %v816, %v814
      %v871 = vpack.c.b16 %v817, %v815
      %v872 = vpack.c.b16 %v820, %v818
      %v873 = vpack.c.b16 %v821, %v819
      %v874 = vpack.c.b16 %v824, %v822
      %v875 = vpack.c.b16 %v825, %v823
      %v876 = vpack.c.b16 %v828, %v826
      %v877 = vpack.c.b16 %v829, %v827
      %v878 = vpack.c.b16 %v832, %v830
      %v879 = vpack.c.b16 %v833, %v831
      %v880 = vpack.c.b16 %v836, %v834
      %v881 = vpack.c.b16 %v837, %v835
      %v882 = vpack.c.b16 %v840, %v838
      %v883 = vpack.c.b16 %v841, %v839
      %v884 = vpack.c.b16 %v844, %v842
      %v885 = vpack.c.b16 %v845, %v843
      %v886 = vpack.c.b16 %v848, %v846
      %v887 = vpack.c.b16 %v849, %v847
      %v888 = vpack.c.b16 %v852, %v850
      %v889 = vpack.c.b16 %v853, %v851
      %v890 = vpack.c.b16 %v856, %v854
      %v891 = vpack.c.b16 %v857, %v855
      %v892 = vpack.c.b16 %v860, %v858
      %v893 = vpack.c.b16 %v861, %v859
      %926 = vmatprep.subr.bf16.mxu0 %v877
      %927 = vmatpush1.bf16.msra.mxu0 %v876
      %928 = vmatprep.subr.bf16.mxu0 %v875
      %929 = vmatpush1.bf16.msra.mxu0 %v874
      %930 = vmatprep.subr.bf16.mxu0 %v873
      %931 = vmatpush1.bf16.msra.mxu0 %v872
      %932 = vmatprep.subr.bf16.mxu0 %v871
      %933 = vmatpush1.bf16.msra.mxu0 %v870
      %934 = vmatprep.subr.bf16.mxu0 %v869
      %935 = vmatpush1.bf16.msra.mxu0 %v868
      %936 = vmatprep.subr.bf16.mxu0 %v867
      %937 = vmatpush1.bf16.msra.mxu0 %v866
      %938 = vmatprep.subr.bf16.mxu0 %v865
      %939 = vmatpush1.bf16.msra.mxu0 %v864
      %940 = vmatprep.subr.bf16.mxu0 %v863
      %941 = vmatpush1.bf16.msra.mxu0 %v862
      %942 = vmatprep.subr.bf16.mxu0 %v893
      %943 = vmatpush2.bf16.msra.mxu0 %v892
      %944 = vmatprep.subr.bf16.mxu0 %v891
      %945 = vmatpush2.bf16.msra.mxu0 %v890
      %946 = vmatprep.subr.bf16.mxu0 %v889
      %947 = vmatpush2.bf16.msra.mxu0 %v888
      %948 = vmatprep.subr.bf16.mxu0 %v887
      %949 = vmatpush2.bf16.msra.mxu0 %v886
      %950 = vmatprep.subr.bf16.mxu0 %v885
      %951 = vmatpush2.bf16.msra.mxu0 %v884
      %952 = vmatprep.subr.bf16.mxu0 %v883
      %953 = vmatpush2.bf16.msra.mxu0 %v882
      %954 = vmatprep.subr.bf16.mxu0 %v881
      %955 = vmatpush2.bf16.msra.mxu0 %v880
      %956 = vmatprep.subr.bf16.mxu0 %v879
      %957 = vmatpush2.bf16.msra.mxu0 %v878
      %958 = vmatprep.mubr.bf16.mxu0 %v705
      %959 = vmatmul.mubr.bf16.gmra.mxu0 %v704
      %v960 = vpop.f32.mrf.mxu0
      %v961 = vadd.f32 %v759, %v960
      %v962 = vpop.f32.mrf.mxu0
      %v963 = vadd.f32 %v763, %v962
      %v964 = vpop.f32.mrf.mxu0
      %v965 = vadd.f32 %v759, %v964
      %v966 = vpop.f32.mrf.mxu0
      %v967 = vadd.f32 %v763, %v966
      %968 = vmatprep.mubr.bf16.mxu0 %v707
      %969 = vmatmul.mubr.bf16.gmra.mxu0 %v706
      %v970 = vpop.f32.mrf.mxu0
      %v971 = vadd.f32 %v759, %v970
      %v972 = vpop.f32.mrf.mxu0
      %v973 = vadd.f32 %v763, %v972
      %v974 = vpop.f32.mrf.mxu0
      %v975 = vadd.f32 %v759, %v974
      %v976 = vpop.f32.mrf.mxu0
      %v977 = vadd.f32 %v763, %v976
      %978 = vmatprep.mubr.bf16.mxu0 %v709
      %979 = vmatmul.mubr.bf16.gmra.mxu0 %v708
      %v980 = vpop.f32.mrf.mxu0
      %v981 = vadd.f32 %v759, %v980
      %v982 = vpop.f32.mrf.mxu0
      %v983 = vadd.f32 %v763, %v982
      %v984 = vpop.f32.mrf.mxu0
      %v985 = vadd.f32 %v759, %v984
      %v986 = vpop.f32.mrf.mxu0
      %v987 = vadd.f32 %v763, %v986
      %988 = vmatprep.mubr.bf16.mxu0 %v711
      %989 = vmatmul.mubr.bf16.gmra.mxu0 %v710
      %v990 = vpop.f32.mrf.mxu0
      %v991 = vadd.f32 %v759, %v990
      %v992 = vpop.f32.mrf.mxu0
      %v993 = vadd.f32 %v763, %v992
      %v994 = vpop.f32.mrf.mxu0
      %v995 = vadd.f32 %v759, %v994
      %v996 = vpop.f32.mrf.mxu0
      %v997 = vadd.f32 %v763, %v996
      %998 = vmatprep.mubr.bf16.mxu0 %v713
      %999 = vmatmul.mubr.bf16.gmra.mxu0 %v712
      %v1000 = vpop.f32.mrf.mxu0
      %v1001 = vadd.f32 %v759, %v1000
      %v1002 = vpop.f32.mrf.mxu0
      %v1003 = vadd.f32 %v763, %v1002
      %v1004 = vpop.f32.mrf.mxu0
      %v1005 = vadd.f32 %v759, %v1004
      %v1006 = vpop.f32.mrf.mxu0
      %v1007 = vadd.f32 %v763, %v1006
      %1008 = vmatprep.mubr.bf16.mxu0 %v715
      %1009 = vmatmul.mubr.bf16.gmra.mxu0 %v714
      %v1010 = vpop.f32.mrf.mxu0
      %v1011 = vadd.f32 %v759, %v1010
      %v1012 = vpop.f32.mrf.mxu0
      %v1013 = vadd.f32 %v763, %v1012
      %v1014 = vpop.f32.mrf.mxu0
      %v1015 = vadd.f32 %v759, %v1014
      %v1016 = vpop.f32.mrf.mxu0
      %v1017 = vadd.f32 %v763, %v1016
      %1018 = vmatprep.mubr.bf16.mxu0 %v717
      %1019 = vmatmul.mubr.bf16.gmra.mxu0 %v716
      %v1020 = vpop.f32.mrf.mxu0
      %v1021 = vadd.f32 %v759, %v1020
      %v1022 = vpop.f32.mrf.mxu0
      %v1023 = vadd.f32 %v763, %v1022
      %v1024 = vpop.f32.mrf.mxu0
      %v1025 = vadd.f32 %v759, %v1024
      %v1026 = vpop.f32.mrf.mxu0
      %v1027 = vadd.f32 %v763, %v1026
      %1028 = vmatprep.mubr.bf16.mxu0 %v719
      %1029 = vmatmul.mubr.bf16.gmra.mxu0 %v718
      %v1030 = vpop.f32.mrf.mxu0
      %v1031 = vadd.f32 %v759, %v1030
      %v1032 = vpop.f32.mrf.mxu0
      %v1033 = vadd.f32 %v763, %v1032
      %v1034 = vpop.f32.mrf.mxu0
      %v1035 = vadd.f32 %v759, %v1034
      %v1036 = vpop.f32.mrf.mxu0
      %v1037 = vadd.f32 %v763, %v1036
      %1038 = vmatprep.mubr.bf16.mxu0 %v721
      %1039 = vmatmul.mubr.bf16.gmra.mxu0 %v720
      %v1040 = vpop.f32.mrf.mxu0
      %v1041 = vadd.f32 %v759, %v1040
      %v1042 = vpop.f32.mrf.mxu0
      %v1043 = vadd.f32 %v763, %v1042
      %v1044 = vpop.f32.mrf.mxu0
      %v1045 = vadd.f32 %v759, %v1044
      %v1046 = vpop.f32.mrf.mxu0
      %v1047 = vadd.f32 %v763, %v1046
      %1048 = vdwg.mxu0
      %vm1049 = vcmp.gt.f32.partialorder %v961, 0.01
      %vm1050 = vcmp.gt.f32.partialorder %v963, 0.01
      %vm1051 = vcmp.gt.f32.partialorder %v965, 0.01
      %vm1052 = vcmp.gt.f32.partialorder %v967, 0.01
      %vm1053 = vcmp.gt.f32.partialorder %v971, 0.01
      %vm1054 = vcmp.gt.f32.partialorder %v973, 0.01
      %vm1055 = vcmp.gt.f32.partialorder %v975, 0.01
      %vm1056 = vcmp.gt.f32.partialorder %v977, 0.01
      %vm1057 = vcmp.gt.f32.partialorder %v981, 0.01
      %vm1058 = vcmp.gt.f32.partialorder %v983, 0.01
      %vm1059 = vcmp.gt.f32.partialorder %v985, 0.01
      %vm1060 = vcmp.gt.f32.partialorder %v987, 0.01
      %vm1061 = vcmp.gt.f32.partialorder %v991, 0.01
      %vm1062 = vcmp.gt.f32.partialorder %v993, 0.01
      %vm1063 = vcmp.gt.f32.partialorder %v995, 0.01
      %vm1064 = vcmp.gt.f32.partialorder %v997, 0.01
      %vm1065 = vcmp.gt.f32.partialorder %v1001, 0.01
      %vm1066 = vcmp.gt.f32.partialorder %v1003, 0.01
      %vm1067 = vcmp.gt.f32.partialorder %v1005, 0.01
      %vm1068 = vcmp.gt.f32.partialorder %v1007, 0.01
      %vm1069 = vcmp.gt.f32.partialorder %v1011, 0.01
      %vm1070 = vcmp.gt.f32.partialorder %v1013, 0.01
      %vm1071 = vcmp.gt.f32.partialorder %v1015, 0.01
      %vm1072 = vcmp.gt.f32.partialorder %v1017, 0.01
      %vm1073 = vcmp.gt.f32.partialorder %v1021, 0.01
      %vm1074 = vcmp.gt.f32.partialorder %v1023, 0.01
      %vm1075 = vcmp.gt.f32.partialorder %v1025, 0.01
      %vm1076 = vcmp.gt.f32.partialorder %v1027, 0.01
      %vm1077 = vcmp.gt.f32.partialorder %v1031, 0.01
      %vm1078 = vcmp.gt.f32.partialorder %v1033, 0.01
      %vm1079 = vcmp.gt.f32.partialorder %v1035, 0.01
      %vm1080 = vcmp.gt.f32.partialorder %v1037, 0.01
      %vm1081 = vcmp.gt.f32.partialorder %v1041, 0.01
      %vm1082 = vcmp.gt.f32.partialorder %v1043, 0.01
      %vm1083 = vcmp.gt.f32.partialorder %v1045, 0.01
      %vm1084 = vcmp.gt.f32.partialorder %v1047, 0.01
      %v1085 = vsub.f32 %v961, 0.01
      %v1086 = vsub.f32 %v963, 0.01
      %v1087 = vsub.f32 %v965, 0.01
      %v1088 = vsub.f32 %v967, 0.01
      %v1089 = vsub.f32 %v971, 0.01
      %v1090 = vsub.f32 %v973, 0.01
      %v1091 = vsub.f32 %v975, 0.01
      %v1092 = vsub.f32 %v977, 0.01
      %v1093 = vsub.f32 %v981, 0.01
      %v1094 = vsub.f32 %v983, 0.01
      %v1095 = vsub.f32 %v985, 0.01
      %v1096 = vsub.f32 %v987, 0.01
      %v1097 = vsub.f32 %v991, 0.01
      %v1098 = vsub.f32 %v993, 0.01
      %v1099 = vsub.f32 %v995, 0.01
      %v1100 = vsub.f32 %v997, 0.01
      %v1101 = vsub.f32 %v1001, 0.01
      %v1102 = vsub.f32 %v1003, 0.01
      %v1103 = vsub.f32 %v1005, 0.01
      %v1104 = vsub.f32 %v1007, 0.01
      %v1105 = vsub.f32 %v1011, 0.01
      %v1106 = vsub.f32 %v1013, 0.01
      %v1107 = vsub.f32 %v1015, 0.01
      %v1108 = vsub.f32 %v1017, 0.01
      %v1109 = vsub.f32 %v1021, 0.01
      %v1110 = vsub.f32 %v1023, 0.01
      %v1111 = vsub.f32 %v1025, 0.01
      %v1112 = vsub.f32 %v1027, 0.01
      %v1113 = vsub.f32 %v1031, 0.01
      %v1114 = vsub.f32 %v1033, 0.01
      %v1115 = vsub.f32 %v1035, 0.01
      %v1116 = vsub.f32 %v1037, 0.01
      %v1117 = vsub.f32 %v1041, 0.01
      %v1118 = vsub.f32 %v1043, 0.01
      %v1119 = vsub.f32 %v1045, 0.01
      %v1120 = vsub.f32 %v1047, 0.01
      %vm1121 = vcmp.lt.f32.partialorder %v961, -0.01
      %vm1122 = vcmp.lt.f32.partialorder %v963, -0.01
      %vm1123 = vcmp.lt.f32.partialorder %v965, -0.01
      %vm1124 = vcmp.lt.f32.partialorder %v967, -0.01
      %vm1125 = vcmp.lt.f32.partialorder %v971, -0.01
      %vm1126 = vcmp.lt.f32.partialorder %v973, -0.01
      %vm1127 = vcmp.lt.f32.partialorder %v975, -0.01
      %vm1128 = vcmp.lt.f32.partialorder %v977, -0.01
      %vm1129 = vcmp.lt.f32.partialorder %v981, -0.01
      %vm1130 = vcmp.lt.f32.partialorder %v983, -0.01
      %vm1131 = vcmp.lt.f32.partialorder %v985, -0.01
      %vm1132 = vcmp.lt.f32.partialorder %v987, -0.01
      %vm1133 = vcmp.lt.f32.partialorder %v991, -0.01
      %vm1134 = vcmp.lt.f32.partialorder %v993, -0.01
      %vm1135 = vcmp.lt.f32.partialorder %v995, -0.01
      %vm1136 = vcmp.lt.f32.partialorder %v997, -0.01
      %vm1137 = vcmp.lt.f32.partialorder %v1001, -0.01
      %vm1138 = vcmp.lt.f32.partialorder %v1003, -0.01
      %vm1139 = vcmp.lt.f32.partialorder %v1005, -0.01
      %vm1140 = vcmp.lt.f32.partialorder %v1007, -0.01
      %vm1141 = vcmp.lt.f32.partialorder %v1011, -0.01
      %vm1142 = vcmp.lt.f32.partialorder %v1013, -0.01
      %vm1143 = vcmp.lt.f32.partialorder %v1015, -0.01
      %vm1144 = vcmp.lt.f32.partialorder %v1017, -0.01
      %vm1145 = vcmp.lt.f32.partialorder %v1021, -0.01
      %vm1146 = vcmp.lt.f32.partialorder %v1023, -0.01
      %vm1147 = vcmp.lt.f32.partialorder %v1025, -0.01
      %vm1148 = vcmp.lt.f32.partialorder %v1027, -0.01
      %vm1149 = vcmp.lt.f32.partialorder %v1031, -0.01
      %vm1150 = vcmp.lt.f32.partialorder %v1033, -0.01
      %vm1151 = vcmp.lt.f32.partialorder %v1035, -0.01
      %vm1152 = vcmp.lt.f32.partialorder %v1037, -0.01
      %vm1153 = vcmp.lt.f32.partialorder %v1041, -0.01
      %vm1154 = vcmp.lt.f32.partialorder %v1043, -0.01
      %vm1155 = vcmp.lt.f32.partialorder %v1045, -0.01
      %vm1156 = vcmp.lt.f32.partialorder %v1047, -0.01
      %v1157 = vadd.f32 %v961, 0.01
      %v1158 = vadd.f32 %v963, 0.01
      %v1159 = vadd.f32 %v965, 0.01
      %v1160 = vadd.f32 %v967, 0.01
      %v1161 = vadd.f32 %v971, 0.01
      %v1162 = vadd.f32 %v973, 0.01
      %v1163 = vadd.f32 %v975, 0.01
      %v1164 = vadd.f32 %v977, 0.01
      %v1165 = vadd.f32 %v981, 0.01
      %v1166 = vadd.f32 %v983, 0.01
      %v1167 = vadd.f32 %v985, 0.01
      %v1168 = vadd.f32 %v987, 0.01
      %v1169 = vadd.f32 %v991, 0.01
      %v1170 = vadd.f32 %v993, 0.01
      %v1171 = vadd.f32 %v995, 0.01
      %v1172 = vadd.f32 %v997, 0.01
      %v1173 = vadd.f32 %v1001, 0.01
      %v1174 = vadd.f32 %v1003, 0.01
      %v1175 = vadd.f32 %v1005, 0.01
      %v1176 = vadd.f32 %v1007, 0.01
      %v1177 = vadd.f32 %v1011, 0.01
      %v1178 = vadd.f32 %v1013, 0.01
      %v1179 = vadd.f32 %v1015, 0.01
      %v1180 = vadd.f32 %v1017, 0.01
      %v1181 = vadd.f32 %v1021, 0.01
      %v1182 = vadd.f32 %v1023, 0.01
      %v1183 = vadd.f32 %v1025, 0.01
      %v1184 = vadd.f32 %v1027, 0.01
      %v1185 = vadd.f32 %v1031, 0.01
      %v1186 = vadd.f32 %v1033, 0.01
      %v1187 = vadd.f32 %v1035, 0.01
      %v1188 = vadd.f32 %v1037, 0.01
      %v1189 = vadd.f32 %v1041, 0.01
      %v1190 = vadd.f32 %v1043, 0.01
      %v1191 = vadd.f32 %v1045, 0.01
      %v1192 = vadd.f32 %v1047, 0.01
      %v1193 = vsel %vm1121, %v1157, 0.0
      %v1194 = vsel %vm1122, %v1158, 0.0
      %v1195 = vsel %vm1123, %v1159, 0.0
      %v1196 = vsel %vm1124, %v1160, 0.0
      %v1197 = vsel %vm1125, %v1161, 0.0
      %v1198 = vsel %vm1126, %v1162, 0.0
      %v1199 = vsel %vm1127, %v1163, 0.0
      %v1200 = vsel %vm1128, %v1164, 0.0
      %v1201 = vsel %vm1129, %v1165, 0.0
      %v1202 = vsel %vm1130, %v1166, 0.0
      %v1203 = vsel %vm1131, %v1167, 0.0
      %v1204 = vsel %vm1132, %v1168, 0.0
      %v1205 = vsel %vm1133, %v1169, 0.0
      %v1206 = vsel %vm1134, %v1170, 0.0
      %v1207 = vsel %vm1135, %v1171, 0.0
      %v1208 = vsel %vm1136, %v1172, 0.0
      %v1209 = vsel %vm1137, %v1173, 0.0
      %v1210 = vsel %vm1138, %v1174, 0.0
      %v1211 = vsel %vm1139, %v1175, 0.0
      %v1212 = vsel %vm1140, %v1176, 0.0
      %v1213 = vsel %vm1141, %v1177, 0.0
      %v1214 = vsel %vm1142, %v1178, 0.0
      %v1215 = vsel %vm1143, %v1179, 0.0
      %v1216 = vsel %vm1144, %v1180, 0.0
      %v1217 = vsel %vm1145, %v1181, 0.0
      %v1218 = vsel %vm1146, %v1182, 0.0
      %v1219 = vsel %vm1147, %v1183, 0.0
      %v1220 = vsel %vm1148, %v1184, 0.0
      %v1221 = vsel %vm1149, %v1185, 0.0
      %v1222 = vsel %vm1150, %v1186, 0.0
      %v1223 = vsel %vm1151, %v1187, 0.0
      %v1224 = vsel %vm1152, %v1188, 0.0
      %v1225 = vsel %vm1153, %v1189, 0.0
      %v1226 = vsel %vm1154, %v1190, 0.0
      %v1227 = vsel %vm1155, %v1191, 0.0
      %v1228 = vsel %vm1156, %v1192, 0.0
      %v1229 = vsel %vm1049, %v1085, %v1193
      %v1230 = vsel %vm1050, %v1086, %v1194
      %v1231 = vsel %vm1051, %v1087, %v1195
      %v1232 = vsel %vm1052, %v1088, %v1196
      %v1233 = vsel %vm1053, %v1089, %v1197
      %v1234 = vsel %vm1054, %v1090, %v1198
      %v1235 = vsel %vm1055, %v1091, %v1199
      %v1236 = vsel %vm1056, %v1092, %v1200
      %v1237 = vsel %vm1057, %v1093, %v1201
      %v1238 = vsel %vm1058, %v1094, %v1202
      %v1239 = vsel %vm1059, %v1095, %v1203
      %v1240 = vsel %vm1060, %v1096, %v1204
      %v1241 = vsel %vm1061, %v1097, %v1205
      %v1242 = vsel %vm1062, %v1098, %v1206
      %v1243 = vsel %vm1063, %v1099, %v1207
      %v1244 = vsel %vm1064, %v1100, %v1208
      %v1245 = vsel %vm1065, %v1101, %v1209
      %v1246 = vsel %vm1066, %v1102, %v1210
      %v1247 = vsel %vm1067, %v1103, %v1211
      %v1248 = vsel %vm1068, %v1104, %v1212
      %v1249 = vsel %vm1069, %v1105, %v1213
      %v1250 = vsel %vm1070, %v1106, %v1214
      %v1251 = vsel %vm1071, %v1107, %v1215
      %v1252 = vsel %vm1072, %v1108, %v1216
      %v1253 = vsel %vm1073, %v1109, %v1217
      %v1254 = vsel %vm1074, %v1110, %v1218
      %v1255 = vsel %vm1075, %v1111, %v1219
      %v1256 = vsel %vm1076, %v1112, %v1220
      %v1257 = vsel %vm1077, %v1113, %v1221
      %v1258 = vsel %vm1078, %v1114, %v1222
      %v1259 = vsel %vm1079, %v1115, %v1223
      %v1260 = vsel %vm1080, %v1116, %v1224
      %v1261 = vsel %vm1081, %v1117, %v1225
      %v1262 = vsel %vm1082, %v1118, %v1226
      %v1263 = vsel %vm1083, %v1119, %v1227
      %v1264 = vsel %vm1084, %v1120, %v1228
      %v1265 = vpack.c.bf16 %v1231, %v1229
      %v1266 = vpack.c.bf16 %v1232, %v1230
      %v1267 = vpack.c.bf16 %v1235, %v1233
      %v1268 = vpack.c.bf16 %v1236, %v1234
      %v1269 = vpack.c.bf16 %v1239, %v1237
      %v1270 = vpack.c.bf16 %v1240, %v1238
      %v1271 = vpack.c.bf16 %v1243, %v1241
      %v1272 = vpack.c.bf16 %v1244, %v1242
      %v1273 = vpack.c.bf16 %v1247, %v1245
      %v1274 = vpack.c.bf16 %v1248, %v1246
      %v1275 = vpack.c.bf16 %v1251, %v1249
      %v1276 = vpack.c.bf16 %v1252, %v1250
      %v1277 = vpack.c.bf16 %v1255, %v1253
      %v1278 = vpack.c.bf16 %v1256, %v1254
      %v1279 = vpack.c.bf16 %v1259, %v1257
      %v1280 = vpack.c.bf16 %v1260, %v1258
      %v1281 = vpack.c.bf16 %v1263, %v1261
      %v1282 = vpack.c.bf16 %v1264, %v1262
      %v1301 = vunpack.c.l.b16 %v1265
      %v1302 = vunpack.c.l.b16 %v1266
      %v1303 = vunpack.c.h.b16 %v1265
      %v1304 = vunpack.c.h.b16 %v1266
      %v1305 = vunpack.c.l.b16 %v1267
      %v1306 = vunpack.c.l.b16 %v1268
      %v1307 = vunpack.c.h.b16 %v1267
      %v1308 = vunpack.c.h.b16 %v1268
      %v1309 = vunpack.c.l.b16 %v1269
      %v1310 = vunpack.c.l.b16 %v1270
      %v1311 = vunpack.c.h.b16 %v1269
      %v1312 = vunpack.c.h.b16 %v1270
      %v1313 = vunpack.c.l.b16 %v1271
      %v1314 = vunpack.c.l.b16 %v1272
      %v1315 = vunpack.c.h.b16 %v1271
      %v1316 = vunpack.c.h.b16 %v1272
      %v1317 = vunpack.c.l.b16 %v1273
      %v1318 = vunpack.c.l.b16 %v1274
      %v1319 = vunpack.c.h.b16 %v1273
      %v1320 = vunpack.c.h.b16 %v1274
      %v1321 = vunpack.c.l.b16 %v1275
      %v1322 = vunpack.c.l.b16 %v1276
      %v1323 = vunpack.c.h.b16 %v1275
      %v1324 = vunpack.c.h.b16 %v1276
      %v1325 = vunpack.c.l.b16 %v1277
      %v1326 = vunpack.c.l.b16 %v1278
      %v1327 = vunpack.c.h.b16 %v1277
      %v1328 = vunpack.c.h.b16 %v1278
      %v1329 = vunpack.c.l.b16 %v1279
      %v1330 = vunpack.c.l.b16 %v1280
      %v1331 = vunpack.c.h.b16 %v1279
      %v1332 = vunpack.c.h.b16 %v1280
      %v1333 = vunpack.c.l.b16 %v1281
      %v1334 = vunpack.c.l.b16 %v1282
      %v1335 = vunpack.c.h.b16 %v1281
      %v1336 = vunpack.c.h.b16 %v1282
      %v1337 = vpack.c.b16 %v1302, %v1301
      %v1338 = vpack.c.b16 %v1304, %v1303
      %v1339 = vpack.c.b16 %v1306, %v1305
      %v1340 = vpack.c.b16 %v1308, %v1307
      %v1341 = vpack.c.b16 %v1310, %v1309
      %v1342 = vpack.c.b16 %v1312, %v1311
      %v1343 = vpack.c.b16 %v1314, %v1313
      %v1344 = vpack.c.b16 %v1316, %v1315
      %v1345 = vpack.c.b16 %v1318, %v1317
      %v1346 = vpack.c.b16 %v1320, %v1319
      %v1347 = vpack.c.b16 %v1322, %v1321
      %v1348 = vpack.c.b16 %v1324, %v1323
      %v1349 = vpack.c.b16 %v1326, %v1325
      %v1350 = vpack.c.b16 %v1328, %v1327
      %v1351 = vpack.c.b16 %v1330, %v1329
      %v1352 = vpack.c.b16 %v1332, %v1331
      %v1353 = vpack.c.b16 %v1334, %v1333
      %v1354 = vpack.c.b16 %v1336, %v1335
      %1373 = vst [vmem:[%s231] sm:$0xff] %v1337
      %1374 = vst [vmem:[%s231 + $0x8] sm:$0xff] %v1338
      %1375 = vst [vmem:[%s231 + $0x10] sm:$0xff] %v1339
      %1376 = vst [vmem:[%s231 + $0x18] sm:$0xff] %v1340
      %1377 = vst [vmem:[%s231 + $0x20] sm:$0xff] %v1341
      %1378 = vst [vmem:[%s231 + $0x28] sm:$0xff] %v1342
      %1379 = vst [vmem:[%s231 + $0x30] sm:$0xff] %v1343
      %1380 = vst [vmem:[%s231 + $0x38] sm:$0xff] %v1344
      %1381 = vst [vmem:[%s231 + $0x40] sm:$0xff] %v1345
      %1382 = vst [vmem:[%s231 + $0x48] sm:$0xff] %v1346
      %1383 = vst [vmem:[%s231 + $0x50] sm:$0xff] %v1347
      %1384 = vst [vmem:[%s231 + $0x58] sm:$0xff] %v1348
      %1385 = vst [vmem:[%s231 + $0x60] sm:$0xff] %v1349
      %1386 = vst [vmem:[%s231 + $0x68] sm:$0xff] %v1350
      %1387 = vst [vmem:[%s231 + $0x70] sm:$0xff] %v1351
      %1388 = vst [vmem:[%s231 + $0x78] sm:$0xff] %v1352
      %1389 = vst [vmem:[%s231 + $0x80] sm:$0xff] %v1353
      %1390 = vst [vmem:[%s231 + $0x88] sm:$0xff] %v1354
      %s1391 = smul.u32 18, %s16
      %p1392 = scmp.lt.s32.totalorder %s1391, 35
      %s1393 = scalar_select %p1392, %s1391, 35
      %s1394 = smul.addr %s1393, 2
      %s1395 = smul.addr %s1394, 4
      %s1396 = scalar_lea.vmem %s5, %s1395
      // Predicated region
      $region41: #{afno2d_forward.1} parent=39 // pred_check
        %p1397 = pneg %p144
      $region42: #{afno2d_forward.1} parent=39 // pred_check_branch
        %1399 = sbr.rel (%p1397) target = $region44
      $region43: #{afno2d_forward.1} parent=39 // pred_region
        %s1400 = smul.u32 18, %s16
      $region44: #{afno2d_forward.1} parent=39 // pred_fallthru
        _
    $region40: #{afno2d_forward.1} parent=5 // pred_fallthru
      _
    %p1401 = scmp.le.s32.totalorder 2, %s11
    // Predicated region
    $region45: #{afno2d_forward.1} parent=5 // pred_check
      %p1402 = pneg %p1401
    $region46: #{afno2d_forward.1} parent=5 // pred_check_branch
      %1404 = sbr.rel (%p1402) target = $region48
    $region47: #{afno2d_forward.1} parent=5 // pred_region
      %s1405 = ssub.s32 %s11, 2
      // Predicated region
      $region49: #{afno2d_forward.1} parent=47 // pred_check
        %p1406 = pneg %p150
      $region50: #{afno2d_forward.1} parent=47 // pred_check_branch
        %1408 = sbr.rel (%p1406) target = $region52
      $region51: #{afno2d_forward.1} parent=47 // pred_region
        %s1409 = smul.u32 18, %s17
        %p1410 = scmp.lt.s32.totalorder %s1409, 35
        %s1411 = scalar_select %p1410, %s1409, 35
        %s1412 = smul.addr %s1411, 2
        %s1413 = smul.addr %s1412, 4
        %s1414 = scalar_lea.vmem %s5, %s1413
      $region52: #{afno2d_forward.1} parent=47 // pred_fallthru
        _
    $region48: #{afno2d_forward.1} parent=5 // pred_fallthru
      _
  $region6: #{afno2d_forward.1} parent=0 // loop_footer
    %s15 = sadd.s32 1, %s11
  $region7: #{afno2d_forward.1} parent=0 // loop_footer_branch
    %10 = sbr.rel target = $region3
  $region8: #{afno2d_forward.1} parent=0 // loop_exit
    _

</llo_original>
